<compile_context>
chip_gen: v7x
topology: tpu7x:2x2x1
jax: 0.10.0
libtpu: 0.0.40
codegen_flags: <defaults>
</compile_context>

<pallas_src>
import math
import functools

import jax
import jax.numpy as jnp
from jax.experimental import pallas as pl
from jax.experimental.pallas import tpu as pltpu

# ----------------------- small deterministic config -------------------------
# (mirrors MistralConfig fields relevant to the forward pass, scaled down;
#  NHEADS*HEAD_DIM == EMB as in the real config)
VOCAB = 256
EMB = 128                    # emb_dim (lane-dense: multiple of 128)
NHEADS = 4                   # nheads
KVHEADS = 2                  # kvheads (GQA)
HEAD_DIM = 32                # head_dim
NLAYERS = 2                  # nlayers
HIDDEN_GROW = 14336.0 / 4096.0
MULTIPLE_OF = 128
NORM_EPS = 1e-5
ROPE_BASE = 1000000.0
SLIDING_WINDOW = 4000        # >> S at these test sizes -> purely causal in practice
PAD_ID = -1                  # nn.Embedding padding_idx only zeroes grads; forward is a gather

_hid = int(HIDDEN_GROW * EMB)
HIDDEN = MULTIPLE_OF * ((_hid + MULTIPLE_OF - 1) // MULTIPLE_OF)   # 512 (lane-dense)

B = 2
S = 8
BS = B * S

Q_W = NHEADS * HEAD_DIM            # 128
KV_W = KVHEADS * HEAD_DIM          # 64
QKV_W = Q_W + 2 * KV_W             # 256


# ------------------------------ Pallas kernel -------------------------------
def mistral_stack_kernel(x_ref, cos_ref, sin_ref, mask_ref, dec_w_ref,
                         ln_w_ref, ffln_w_ref,
                         wqkv_ref, wd_ref, wg1_ref, w2_ref,
                         o_ref, x_vmem,
                         *, nheads, kvheads, head_dim, hidden, eps):
    l = pl.program_id(0)                      # layer index ("arbitrary")
    nlayers = pl.num_programs(0)

    @pl.when(l == 0)
    def _():                                  # load the full hidden state once
        x_vmem[...] = x_ref[...]

    x = x_vmem[...]                           # [BS, EMB] f32, resident across layers
    bs = x.shape[0]
    rep = nheads // kvheads
    qw = nheads * head_dim
    kw = kvheads * head_dim

    def rms(v):                               # LayerNormParameterized(use_mean=False)
        return v * jax.lax.rsqrt(jnp.mean(v * v, axis=-1, keepdims=True) + eps)

    # ---------------------------- attention -------------------------------
    h = (rms(x) * ln_w_ref[0]).astype(jnp.bfloat16)                      # [BS, EMB]

    # One lane-dense fused projection: columns = [Q(128) | K(64) | V(64)].
    qkv = jnp.dot(h, wqkv_ref[0], preferred_element_type=jnp.float32)    # [BS, 256]

    # RoPE (FMS complex/interleaved convention) applied in-kernel to the whole
    # slab; cos==1 / sin==0 over the V columns so V passes through unchanged.
    # pair-swap: swapped[2i] = x[2i+1], swapped[2i+1] = x[2i]; the sign
    # (-sin on even columns, +sin on odd columns) is baked into the sin table.
    even = (jax.lax.broadcasted_iota(jnp.int32, qkv.shape, 1) % 2) == 0
    nxt = pltpu.roll(qkv, shift=qkv.shape[1] - 1, axis=1)   # out[j] = x[j+1]
    prv = pltpu.roll(qkv, shift=1, axis=1)                  # out[j] = x[j-1]
    swapped = jnp.where(even, nxt, prv)
    qkv = qkv * cos_ref[...] + swapped * sin_ref[...]

    # head split: small one-time relayout (32-lane slices stacked on a major dim)
    qh = jnp.stack([qkv[:, hh * head_dim:(hh + 1) * head_dim]
                    for hh in range(nheads)], axis=0)                    # [NH, BS, HD]
    kh = jnp.stack([qkv[:, qw + g * head_dim: qw + (g + 1) * head_dim]
                    for g in range(kvheads)], axis=0)                    # [KV, BS, HD]
    vh = jnp.stack([qkv[:, qw + kw + g * head_dim: qw + kw + (g + 1) * head_dim]
                    for g in range(kvheads)], axis=0)                    # [KV, BS, HD]

    # GQA: replicate each kv head across its `rep` query heads (major-dim only)
    kf = jnp.broadcast_to(kh[:, None], (kvheads, rep, bs, head_dim)).reshape(nheads, bs, head_dim)
    vf = jnp.broadcast_to(vh[:, None], (kvheads, rep, bs, head_dim)).reshape(nheads, bs, head_dim)

    # block-diagonal (per-batch) causal + sliding-window attention, batched over heads
    scale = 1.0 / math.sqrt(head_dim)
    sc = jnp.einsum('hqd,hkd->hqk',
                    (qh * scale).astype(jnp.bfloat16), kf.astype(jnp.bfloat16),
                    preferred_element_type=jnp.float32)                  # [NH, BS, BS]
    sc = sc + mask_ref[...][None]                                        # additive 0 / -1e30
    sc = sc - jnp.max(sc, axis=-1, keepdims=True)
    p = jnp.exp(sc)
    p = p * pl.reciprocal(jnp.sum(p, axis=-1, keepdims=True), approx=True)
    ao = jnp.einsum('hqk,hkd->hqd', p.astype(jnp.bfloat16), vf.astype(jnp.bfloat16),
                    preferred_element_type=jnp.float32)                  # [NH, BS, HD]

    # merge heads back into lanes once, then a single lane-dense output projection
    ao_m = jnp.concatenate([ao[hh] for hh in range(nheads)],
                           axis=-1).astype(jnp.bfloat16)                 # [BS, NH*HD=128]
    x = x + jnp.dot(ao_m, wd_ref[0], preferred_element_type=jnp.float32)  # residual 1

    # ------------------------------ MLP -----------------------------------
    h2 = (rms(x) * ffln_w_ref[0]).astype(jnp.bfloat16)
    g1 = jnp.dot(h2, wg1_ref[0], preferred_element_type=jnp.float32)     # [BS, 2*HIDDEN]
    wg = g1[:, :hidden]                                                  # lane-aligned split
    w1 = g1[:, hidden:]
    ff = jnp.dot((wg * jax.nn.sigmoid(wg) * w1).astype(jnp.bfloat16), w2_ref[0],
                 preferred_element_type=jnp.float32)
    x = x + ff                                                           # residual 2

    x_vmem[...] = x                                                      # carry to next layer

    @pl.when(l == nlayers - 1)
    def _():                                  # final dec_norm, written once
        o_ref[...] = rms(x) * dec_w_ref[...]


# ------------------------------ Pallas wrapper -------------------------------
def run_mistral_stack(x, params, consts):
    kernel = functools.partial(
        mistral_stack_kernel,
        nheads=NHEADS, kvheads=KVHEADS, head_dim=HEAD_DIM, hidden=HIDDEN, eps=NORM_EPS)

    def bcast(l): return (0, 0)
    def per_layer(l): return (l, 0, 0)

    grid_spec = pltpu.PrefetchScalarGridSpec(
        num_scalar_prefetch=0,
        grid=(NLAYERS,),                         # layers only; batch lives inside the block
        in_specs=[
            pl.BlockSpec((BS, EMB), bcast),                    # hidden state [B*S, EMB]
            pl.BlockSpec((BS, QKV_W), bcast),                  # cos table over QKV columns
            pl.BlockSpec((BS, QKV_W), bcast),                  # signed sin table
            pl.BlockSpec((BS, BS), bcast),                     # block-diag causal mask
            pl.BlockSpec((1, EMB), bcast),                     # dec_norm scale
            pl.BlockSpec((1, 1, EMB), per_layer),              # ln scale (layer l)
            pl.BlockSpec((1, 1, EMB), per_layer),              # ff_ln scale (layer l)
            pl.BlockSpec((1, EMB, QKV_W), per_layer),          # fused Wq|Wk|Wv
            pl.BlockSpec((1, Q_W, EMB), per_layer),            # Wdense
            pl.BlockSpec((1, EMB, 2 * HIDDEN), per_layer),     # fused Wg|W1 (SwiGLU)
            pl.BlockSpec((1, HIDDEN, EMB), per_layer),         # W2 (SwiGLU out)
        ],
        out_specs=pl.BlockSpec((BS, EMB), bcast),
        scratch_shapes=[pltpu.VMEM((BS, EMB), jnp.float32)],   # layer-resident hidden state
    )
    return pl.pallas_call(
        kernel,
        out_shape=jax.ShapeDtypeStruct((BS, EMB), jnp.float32),
        grid_spec=grid_spec,
        compiler_params=pltpu.CompilerParams(
            dimension_semantics=("arbitrary",),
            vmem_limit_bytes=32 * 1024 * 1024),
    )(x, consts["cos"], consts["sin"], consts["mask"], params["dec_w"],
      params["ln_w"], params["ffln_w"],
      params["wqkv"], params["wd"], params["wg1"], params["w2"])


# --------------------------- constants / RoPE tables --------------------------
def build_consts():
    pos = jnp.arange(S, dtype=jnp.float32)
    inv_freq = 1.0 / (ROPE_BASE ** (jnp.arange(0, HEAD_DIM, 2, dtype=jnp.float32) / HEAD_DIM))
    ang = pos[:, None] * inv_freq[None, :]                         # [S, HD/2]
    cos_hd = jnp.repeat(jnp.cos(ang), 2, axis=-1)                  # [S, HD] pairwise-duplicated
    sin_hd = jnp.repeat(jnp.sin(ang), 2, axis=-1)
    sign = jnp.tile(jnp.array([-1.0, 1.0], jnp.float32), HEAD_DIM // 2)   # -sin @even, +sin @odd
    sin_sg = sin_hd * sign[None, :]

    # column layout matches the fused QKV output: [Q(128) | K(64) | V(64)];
    # V columns get cos=1 / sin=0 so RoPE is a no-op there.
    cos_row = jnp.concatenate([jnp.tile(cos_hd, (1, NHEADS)),
                               jnp.tile(cos_hd, (1, KVHEADS)),
                               jnp.ones((S, KV_W), jnp.float32)], axis=1)   # [S, 256]
    sin_row = jnp.concatenate([jnp.tile(sin_sg, (1, NHEADS)),
                               jnp.tile(sin_sg, (1, KVHEADS)),
                               jnp.zeros((S, KV_W), jnp.float32)], axis=1)
    cos_all = jnp.tile(cos_row, (B, 1))                            # [BS, 256] (row = b*S + s)
    sin_all = jnp.tile(sin_row, (B, 1))

    # block-diagonal (per-batch) causal + sliding-window additive mask over [BS, BS]
    r = jnp.arange(BS)
    b_r = r // S
    s_r = r % S
    allowed = ((b_r[:, None] == b_r[None, :]) &
               (s_r[None, :] <= s_r[:, None]) &
               (s_r[None, :] > s_r[:, None] - SLIDING_WINDOW))
    mask = jnp.where(allowed, 0.0, -1e30).astype(jnp.float32)      # [BS, BS]
    return dict(cos=cos_all, sin=sin_all, mask=mask)


def init_params(key):
    k_emb, key = jax.random.split(key)
    emb_w = jax.random.truncated_normal(k_emb, -2.0, 2.0, (VOCAB, EMB),
                                        jnp.float32) * (EMB ** -0.5)

    wqkv, wd, wg1, w2, ln, ffln = ([] for _ in range(6))
    for _ in range(NLAYERS):
        kq, kk, kv_, kd, kg, k1, k2, key = jax.random.split(key, 8)
        wq_l = jax.random.normal(kq, (EMB, Q_W), jnp.float32) * 0.02
        wk_l = jax.random.normal(kk, (EMB, KV_W), jnp.float32) * 0.02
        wv_l = jax.random.normal(kv_, (EMB, KV_W), jnp.float32) * 0.02
        wd_l = jax.random.normal(kd, (Q_W, EMB), jnp.float32) * 0.02
        wg_l = jax.random.normal(kg, (EMB, HIDDEN), jnp.float32) * 0.02
        w1_l = jax.random.normal(k1, (EMB, HIDDEN), jnp.float32) * 0.02
        w2_l = jax.random.normal(k2, (HIDDEN, EMB), jnp.float32) * 0.02

        wqkv.append(jnp.concatenate([wq_l, wk_l, wv_l], axis=1))   # [EMB, 256] fused
        wd.append(wd_l)                                            # [128, EMB]
        wg1.append(jnp.concatenate([wg_l, w1_l], axis=1))          # [EMB, 1024] fused
        w2.append(w2_l)
        ln.append(jnp.ones((1, EMB), jnp.float32))                 # reset_parameters -> ones
        ffln.append(jnp.ones((1, EMB), jnp.float32))

    bf = jnp.bfloat16
    return dict(
        emb_w=emb_w,
        ln_w=jnp.stack(ln), ffln_w=jnp.stack(ffln),
        wqkv=jnp.stack(wqkv).astype(bf), wd=jnp.stack(wd).astype(bf),
        wg1=jnp.stack(wg1).astype(bf), w2=jnp.stack(w2).astype(bf),
        dec_w=jnp.ones((1, EMB), jnp.float32),
    )


# ------------------------------ model forward --------------------------------
def mistral_headless_forward(tokens, params, consts):
    # embedding lookup (glue; torch padding_idx only zeroes that row's gradient)
    x = jnp.take(params["emb_w"], tokens.reshape(-1), axis=0).astype(jnp.float32)  # [BS, EMB]
    dec_out = run_mistral_stack(x, params, consts)
    present_key_value_states = []   # use_cache=False path
    # TODO(synk): KV-cache (use_cache=True) path and external attn_kwargs masks not implemented.
    return dec_out.reshape(B, S, EMB), present_key_value_states


# ----------------------------------- main -------------------------------------
if __name__ == "__main__":
    key = jax.random.PRNGKey(0)
    k_tok, k_par = jax.random.split(key)
    tokens = jax.random.randint(k_tok, (B, S), 0, VOCAB, dtype=jnp.int32)
    params = init_params(k_par)
    consts = build_consts()

    out, _cache = mistral_headless_forward(tokens, params, consts)
    out = jax.block_until_ready(out)
    assert out.shape == (B, S, EMB)
    assert bool(jnp.all(jnp.isfinite(out)))
    print("KERNEL_OK")
</pallas_src>

<mosaic_0001>
module attributes {stable_mosaic.version = 11 : i64} {
  func.func @mistral_stack_kernel(%arg0: i32, %arg1: memref<16x128xf32, #tpu.memory_space<vmem>>, %arg2: memref<16x256xf32, #tpu.memory_space<vmem>>, %arg3: memref<16x256xf32, #tpu.memory_space<vmem>>, %arg4: memref<16x16xf32, #tpu.memory_space<vmem>>, %arg5: memref<1x128xf32, #tpu.memory_space<vmem>>, %arg6: memref<1x1x128xf32, #tpu.memory_space<vmem>>, %arg7: memref<1x1x128xf32, #tpu.memory_space<vmem>>, %arg8: memref<1x128x256xbf16, #tpu.memory_space<vmem>>, %arg9: memref<1x128x128xbf16, #tpu.memory_space<vmem>>, %arg10: memref<1x128x1024xbf16, #tpu.memory_space<vmem>>, %arg11: memref<1x512x128xbf16, #tpu.memory_space<vmem>>, %arg12: memref<16x128xf32, #tpu.memory_space<vmem>>, %arg13: memref<16x128xf32, #tpu.memory_space<vmem>>) attributes {dimension_semantics = [#tpu.dimension_semantics<arbitrary>], iteration_bounds = array<i64: 2>, scalar_prefetch = 0 : i64, scratch_operands = 1 : i64, tpu.core_type = #tpu.core_type<tc>, window_params = [{pipeline_mode = #tpu.pipeline_mode<synchronous>, transform_indices = @transform_0, window_bounds = array<i64: 16, 128>}, {pipeline_mode = #tpu.pipeline_mode<synchronous>, transform_indices = @transform_1, window_bounds = array<i64: 16, 256>}, {pipeline_mode = #tpu.pipeline_mode<synchronous>, transform_indices = @transform_2, window_bounds = array<i64: 16, 256>}, {pipeline_mode = #tpu.pipeline_mode<synchronous>, transform_indices = @transform_3, window_bounds = array<i64: 16, 16>}, {pipeline_mode = #tpu.pipeline_mode<synchronous>, transform_indices = @transform_4, window_bounds = array<i64: 1, 128>}, {transform_indices = @transform_5, window_bounds = array<i64: 1, 1, 128>}, {transform_indices = @transform_6, window_bounds = array<i64: 1, 1, 128>}, {transform_indices = @transform_7, window_bounds = array<i64: 1, 128, 256>}, {transform_indices = @transform_8, window_bounds = array<i64: 1, 128, 128>}, {transform_indices = @transform_9, window_bounds = array<i64: 1, 128, 1024>}, {transform_indices = @transform_10, window_bounds = array<i64: 1, 512, 128>}, {pipeline_mode = #tpu.pipeline_mode<synchronous>, transform_indices = @transform_11, window_bounds = array<i64: 16, 128>}]} {
    %c0_i32 = arith.constant 0 : i32
    %0 = arith.cmpi eq, %arg0, %c0_i32 : i32
    %1 = arith.extui %0 : i1 to i32
    %c0_i32_0 = arith.constant 0 : i32
    %2 = arith.cmpi ne, %1, %c0_i32_0 : i32
    scf.if %2 {
      %c0_51 = arith.constant 0 : index
      %c0_52 = arith.constant 0 : index
      %148 = vector.load %arg1[%c0_51, %c0_52] : memref<16x128xf32, #tpu.memory_space<vmem>>, vector<16x128xf32>
      %c0_53 = arith.constant 0 : index
      %c0_54 = arith.constant 0 : index
      %149 = vector.load %arg13[%c0_53, %c0_54] : memref<16x128xf32, #tpu.memory_space<vmem>>, vector<16x128xf32>
      tpu.vector_store %arg13[%c0_53, %c0_54], %148 {strides = array<i32>} : memref<16x128xf32, #tpu.memory_space<vmem>>, vector<16x128xf32>,
    } else {
    }
    %c0 = arith.constant 0 : index
    %c0_1 = arith.constant 0 : index
    %3 = vector.load %arg13[%c0, %c0_1] : memref<16x128xf32, #tpu.memory_space<vmem>>, vector<16x128xf32>
    %4 = arith.mulf %3, %3 : vector<16x128xf32>
    %cst = arith.constant dense<0.000000e+00> : vector<16xf32>
    %5 = vector.multi_reduction <add>, %4, %cst [1] : vector<16x128xf32> to vector<16xf32>
    %6 = vector.shape_cast %5 : vector<16xf32> to vector<16x1xf32>
    %cst_2 = arith.constant 1.280000e+02 : f32
    %7 = vector.broadcast %cst_2 : f32 to vector<16x1xf32>
    %8 = arith.divf %6, %7 : vector<16x1xf32>
    %cst_3 = arith.constant 9.99999974E-6 : f32
    %9 = vector.broadcast %cst_3 : f32 to vector<16x1xf32>
    %10 = arith.addf %8, %9 : vector<16x1xf32>
    %11 = math.rsqrt %10 : vector<16x1xf32>
    %12 = vector.broadcast %11 : vector<16x1xf32> to vector<16x128xf32>
    %13 = arith.mulf %3, %12 : vector<16x128xf32>
    %c0_4 = arith.constant 0 : index
    %c0_5 = arith.constant 0 : index
    %c0_6 = arith.constant 0 : index
    %14 = vector.load %arg6[%c0_4, %c0_5, %c0_6] : memref<1x1x128xf32, #tpu.memory_space<vmem>>, vector<1x1x128xf32>
    %15 = vector.shape_cast %14 : vector<1x1x128xf32> to vector<1x128xf32>
    %16 = vector.broadcast %15 : vector<1x128xf32> to vector<16x128xf32>
    %17 = arith.mulf %13, %16 : vector<16x128xf32>
    %18 = arith.truncf %17 : vector<16x128xf32> to vector<16x128xbf16>
    %c0_7 = arith.constant 0 : index
    %c0_8 = arith.constant 0 : index
    %c0_9 = arith.constant 0 : index
    %19 = vector.load %arg8[%c0_7, %c0_8, %c0_9] : memref<1x128x256xbf16, #tpu.memory_space<vmem>>, vector<1x128x256xbf16>
    %20 = vector.shape_cast %19 : vector<1x128x256xbf16> to vector<128x256xbf16>
    %cst_10 = arith.constant dense<0.000000e+00> : vector<16x256xf32>
    %21 = tpu.matmul %18, %20, %cst_10 {dimension_numbers = #tpu.dot_dimension_numbers<[1], [0], [0], [1], [0, 0, 1, 1], [], []>} : vector<16x128xbf16>, vector<128x256xbf16>, vector<16x256xf32> -> vector<16x256xf32>
    %22 = tpu.iota {dimensions = array<i32: 1>} : vector<16x256xi32>
    %c2_i32 = arith.constant 2 : i32
    %c0_i32_11 = arith.constant 0 : i32
    %23 = arith.cmpi eq, %c2_i32, %c0_i32_11 : i32
    %c1_i32 = arith.constant 1 : i32
    %24 = arith.select %23, %c1_i32, %c2_i32 : i32
    %25 = vector.broadcast %24 : i32 to vector<16x256xi32>
    %26 = arith.remsi %22, %25 : vector<16x256xi32>
    %c0_i32_12 = arith.constant 0 : i32
    %27 = vector.broadcast %c0_i32_12 : i32 to vector<16x256xi32>
    %28 = arith.cmpi ne, %26, %27 : vector<16x256xi32>
    %c0_i32_13 = arith.constant 0 : i32
    %29 = vector.broadcast %c0_i32_13 : i32 to vector<16x256xi32>
    %30 = arith.cmpi slt, %26, %29 : vector<16x256xi32>
    %c0_i32_14 = arith.constant 0 : i32
    %31 = arith.cmpi slt, %24, %c0_i32_14 : i32
    %32 = vector.broadcast %31 : i1 to vector<16x256xi1>
    %33 = vector.broadcast %32 : vector<16x256xi1> to vector<16x256xi1>
    %34 = arith.xori %30, %33 : vector<16x256xi1>
    %35 = arith.andi %34, %28 : vector<16x256xi1>
    %36 = vector.broadcast %24 : i32 to vector<16x256xi32>
    %37 = arith.addi %26, %36 : vector<16x256xi32>
    %38 = arith.select %35, %37, %26 : vector<16x256xi1>, vector<16x256xi32>
    %c0_i32_15 = arith.constant 0 : i32
    %39 = vector.broadcast %c0_i32_15 : i32 to vector<16x256xi32>
    %40 = arith.cmpi eq, %38, %39 : vector<16x256xi32>
    %c255_i32 = arith.constant 255 : i32
    %41 = tpu.dynamic_rotate %21 by %c255_i32 dim 1 : vector<16x256xf32>, i32 -> vector<16x256xf32>
    %c1_i32_16 = arith.constant 1 : i32
    %42 = tpu.dynamic_rotate %21 by %c1_i32_16 dim 1 : vector<16x256xf32>, i32 -> vector<16x256xf32>
    %43 = arith.select %40, %41, %42 : vector<16x256xi1>, vector<16x256xf32>
    %c0_17 = arith.constant 0 : index
    %c0_18 = arith.constant 0 : index
    %44 = vector.load %arg2[%c0_17, %c0_18] : memref<16x256xf32, #tpu.memory_space<vmem>>, vector<16x256xf32>
    %45 = arith.mulf %21, %44 : vector<16x256xf32>
    %c0_19 = arith.constant 0 : index
    %c0_20 = arith.constant 0 : index
    %46 = vector.load %arg3[%c0_19, %c0_20] : memref<16x256xf32, #tpu.memory_space<vmem>>, vector<16x256xf32>
    %47 = arith.mulf %43, %46 : vector<16x256xf32>
    %48 = arith.addf %45, %47 : vector<16x256xf32>
    %49 = vector.extract_strided_slice %48 {offsets = [0, 0], sizes = [16, 32], strides = [1, 1]} : vector<16x256xf32> to vector<16x32xf32>
    %50 = vector.extract_strided_slice %48 {offsets = [0, 32], sizes = [16, 32], strides = [1, 1]} : vector<16x256xf32> to vector<16x32xf32>
    %51 = vector.extract_strided_slice %48 {offsets = [0, 64], sizes = [16, 32], strides = [1, 1]} : vector<16x256xf32> to vector<16x32xf32>
    %52 = vector.extract_strided_slice %48 {offsets = [0, 96], sizes = [16, 32], strides = [1, 1]} : vector<16x256xf32> to vector<16x32xf32>
    %53 = vector.shape_cast %49 : vector<16x32xf32> to vector<1x16x32xf32>
    %54 = vector.shape_cast %50 : vector<16x32xf32> to vector<1x16x32xf32>
    %55 = vector.shape_cast %51 : vector<16x32xf32> to vector<1x16x32xf32>
    %56 = vector.shape_cast %52 : vector<16x32xf32> to vector<1x16x32xf32>
    %57 = tpu.concatenate %53, %54, %55, %56 in 0 : vector<1x16x32xf32>, vector<1x16x32xf32>, vector<1x16x32xf32>, vector<1x16x32xf32> -> vector<4x16x32xf32>
    %58 = vector.extract_strided_slice %48 {offsets = [0, 128], sizes = [16, 32], strides = [1, 1]} : vector<16x256xf32> to vector<16x32xf32>
    %59 = vector.extract_strided_slice %48 {offsets = [0, 160], sizes = [16, 32], strides = [1, 1]} : vector<16x256xf32> to vector<16x32xf32>
    %60 = vector.shape_cast %58 : vector<16x32xf32> to vector<1x16x32xf32>
    %61 = vector.shape_cast %59 : vector<16x32xf32> to vector<1x16x32xf32>
    %62 = tpu.concatenate %60, %61 in 0 : vector<1x16x32xf32>, vector<1x16x32xf32> -> vector<2x16x32xf32>
    %63 = vector.extract_strided_slice %48 {offsets = [0, 192], sizes = [16, 32], strides = [1, 1]} : vector<16x256xf32> to vector<16x32xf32>
    %64 = vector.extract_strided_slice %48 {offsets = [0, 224], sizes = [16, 32], strides = [1, 1]} : vector<16x256xf32> to vector<16x32xf32>
    %65 = vector.shape_cast %63 : vector<16x32xf32> to vector<1x16x32xf32>
    %66 = vector.shape_cast %64 : vector<16x32xf32> to vector<1x16x32xf32>
    %67 = tpu.concatenate %65, %66 in 0 : vector<1x16x32xf32>, vector<1x16x32xf32> -> vector<2x16x32xf32>
    %68 = vector.shape_cast %62 : vector<2x16x32xf32> to vector<2x1x16x32xf32>
    %69 = vector.shape_cast %68 : vector<2x1x16x32xf32> to vector<2x1x16x32xf32>
    %70 = vector.broadcast %69 : vector<2x1x16x32xf32> to vector<2x2x16x32xf32>
    %71 = vector.shape_cast %70 : vector<2x2x16x32xf32> to vector<4x16x32xf32>
    %72 = vector.shape_cast %67 : vector<2x16x32xf32> to vector<2x1x16x32xf32>
    %73 = vector.shape_cast %72 : vector<2x1x16x32xf32> to vector<2x1x16x32xf32>
    %74 = vector.broadcast %73 : vector<2x1x16x32xf32> to vector<2x2x16x32xf32>
    %75 = vector.shape_cast %74 : vector<2x2x16x32xf32> to vector<4x16x32xf32>
    %cst_21 = arith.constant 0.176776692 : f32
    %76 = vector.broadcast %cst_21 : f32 to vector<4x16x32xf32>
    %77 = arith.mulf %57, %76 : vector<4x16x32xf32>
    %78 = arith.truncf %77 : vector<4x16x32xf32> to vector<4x16x32xbf16>
    %79 = arith.truncf %71 : vector<4x16x32xf32> to vector<4x16x32xbf16>
    "tpu.trace_start"() <{level = 10 : i32, message = "hqd,hkd->hqk"}> : () -> ()
    %cst_22 = arith.constant dense<0.000000e+00> : vector<4x16x16xf32>
    %80 = tpu.matmul %78, %79, %cst_22 {dimension_numbers = #tpu.dot_dimension_numbers<[2], [2], [1], [1], [0, 0, 0, 1, 1, 1], [0], [0]>} : vector<4x16x32xbf16>, vector<4x16x32xbf16>, vector<4x16x16xf32> -> vector<4x16x16xf32>
    "tpu.trace_stop"() : () -> ()
    %c0_23 = arith.constant 0 : index
    %c0_24 = arith.constant 0 : index
    %81 = vector.load %arg4[%c0_23, %c0_24] : memref<16x16xf32, #tpu.memory_space<vmem>>, vector<16x16xf32>
    %82 = vector.shape_cast %81 : vector<16x16xf32> to vector<1x16x16xf32>
    %83 = vector.broadcast %82 : vector<1x16x16xf32> to vector<4x16x16xf32>
    %84 = arith.addf %80, %83 : vector<4x16x16xf32>
    %cst_25 = arith.constant dense<0xFF800000> : vector<4x16xf32>
    %85 = vector.multi_reduction <maximumf>, %84, %cst_25 [2] : vector<4x16x16xf32> to vector<4x16xf32>
    %86 = vector.shape_cast %85 : vector<4x16xf32> to vector<4x16x1xf32>
    %87 = vector.broadcast %86 : vector<4x16x1xf32> to vector<4x16x16xf32>
    %88 = arith.subf %84, %87 : vector<4x16x16xf32>
    %89 = math.exp %88 : vector<4x16x16xf32>
    %cst_26 = arith.constant dense<0.000000e+00> : vector<4x16xf32>
    %90 = vector.multi_reduction <add>, %89, %cst_26 [2] : vector<4x16x16xf32> to vector<4x16xf32>
    %91 = vector.shape_cast %90 : vector<4x16xf32> to vector<4x16x1xf32>
    %92 = tpu.reciprocal %91 {approx = true} : vector<4x16x1xf32> -> vector<4x16x1xf32>
    %93 = vector.broadcast %92 : vector<4x16x1xf32> to vector<4x16x16xf32>
    %94 = arith.mulf %89, %93 : vector<4x16x16xf32>
    %95 = arith.truncf %94 : vector<4x16x16xf32> to vector<4x16x16xbf16>
    %96 = arith.truncf %75 : vector<4x16x32xf32> to vector<4x16x32xbf16>
    "tpu.trace_start"() <{level = 10 : i32, message = "hqk,hkd->hqd"}> : () -> ()
    %cst_27 = arith.constant dense<0.000000e+00> : vector<4x16x32xf32>
    %97 = tpu.matmul %95, %96, %cst_27 {dimension_numbers = #tpu.dot_dimension_numbers<[2], [1], [1], [2], [0, 0, 0, 1, 1, 2], [0], [0]>} : vector<4x16x16xbf16>, vector<4x16x32xbf16>, vector<4x16x32xf32> -> vector<4x16x32xf32>
    "tpu.trace_stop"() : () -> ()
    %98 = vector.extract_strided_slice %97 {offsets = [0, 0, 0], sizes = [1, 16, 32], strides = [1, 1, 1]} : vector<4x16x32xf32> to vector<1x16x32xf32>
    %99 = vector.shape_cast %98 : vector<1x16x32xf32> to vector<16x32xf32>
    %100 = vector.extract_strided_slice %97 {offsets = [1, 0, 0], sizes = [1, 16, 32], strides = [1, 1, 1]} : vector<4x16x32xf32> to vector<1x16x32xf32>
    %101 = vector.shape_cast %100 : vector<1x16x32xf32> to vector<16x32xf32>
    %102 = vector.extract_strided_slice %97 {offsets = [2, 0, 0], sizes = [1, 16, 32], strides = [1, 1, 1]} : vector<4x16x32xf32> to vector<1x16x32xf32>
    %103 = vector.shape_cast %102 : vector<1x16x32xf32> to vector<16x32xf32>
    %104 = vector.extract_strided_slice %97 {offsets = [3, 0, 0], sizes = [1, 16, 32], strides = [1, 1, 1]} : vector<4x16x32xf32> to vector<1x16x32xf32>
    %105 = vector.shape_cast %104 : vector<1x16x32xf32> to vector<16x32xf32>
    %106 = tpu.concatenate %99, %101, %103, %105 in 1 : vector<16x32xf32>, vector<16x32xf32>, vector<16x32xf32>, vector<16x32xf32> -> vector<16x128xf32>
    %107 = arith.truncf %106 : vector<16x128xf32> to vector<16x128xbf16>
    %c0_28 = arith.constant 0 : index
    %c0_29 = arith.constant 0 : index
    %c0_30 = arith.constant 0 : index
    %108 = vector.load %arg9[%c0_28, %c0_29, %c0_30] : memref<1x128x128xbf16, #tpu.memory_space<vmem>>, vector<1x128x128xbf16>
    %109 = vector.shape_cast %108 : vector<1x128x128xbf16> to vector<128x128xbf16>
    %cst_31 = arith.constant dense<0.000000e+00> : vector<16x128xf32>
    %110 = tpu.matmul %107, %109, %cst_31 {dimension_numbers = #tpu.dot_dimension_numbers<[1], [0], [0], [1], [0, 0, 1, 1], [], []>} : vector<16x128xbf16>, vector<128x128xbf16>, vector<16x128xf32> -> vector<16x128xf32>
    %111 = arith.addf %3, %110 : vector<16x128xf32>
    %112 = arith.mulf %111, %111 : vector<16x128xf32>
    %cst_32 = arith.constant dense<0.000000e+00> : vector<16xf32>
    %113 = vector.multi_reduction <add>, %112, %cst_32 [1] : vector<16x128xf32> to vector<16xf32>
    %114 = vector.shape_cast %113 : vector<16xf32> to vector<16x1xf32>
    %cst_33 = arith.constant 1.280000e+02 : f32
    %115 = vector.broadcast %cst_33 : f32 to vector<16x1xf32>
    %116 = arith.divf %114, %115 : vector<16x1xf32>
    %cst_34 = arith.constant 9.99999974E-6 : f32
    %117 = vector.broadcast %cst_34 : f32 to vector<16x1xf32>
    %118 = arith.addf %116, %117 : vector<16x1xf32>
    %119 = math.rsqrt %118 : vector<16x1xf32>
    %120 = vector.broadcast %119 : vector<16x1xf32> to vector<16x128xf32>
    %121 = arith.mulf %111, %120 : vector<16x128xf32>
    %c0_35 = arith.constant 0 : index
    %c0_36 = arith.constant 0 : index
    %c0_37 = arith.constant 0 : index
    %122 = vector.load %arg7[%c0_35, %c0_36, %c0_37] : memref<1x1x128xf32, #tpu.memory_space<vmem>>, vector<1x1x128xf32>
    %123 = vector.shape_cast %122 : vector<1x1x128xf32> to vector<1x128xf32>
    %124 = vector.broadcast %123 : vector<1x128xf32> to vector<16x128xf32>
    %125 = arith.mulf %121, %124 : vector<16x128xf32>
    %126 = arith.truncf %125 : vector<16x128xf32> to vector<16x128xbf16>
    %c0_38 = arith.constant 0 : index
    %c0_39 = arith.constant 0 : index
    %c0_40 = arith.constant 0 : index
    %127 = vector.load %arg10[%c0_38, %c0_39, %c0_40] : memref<1x128x1024xbf16, #tpu.memory_space<vmem>>, vector<1x128x1024xbf16>
    %128 = vector.shape_cast %127 : vector<1x128x1024xbf16> to vector<128x1024xbf16>
    %cst_41 = arith.constant dense<0.000000e+00> : vector<16x1024xf32>
    %129 = tpu.matmul %126, %128, %cst_41 {dimension_numbers = #tpu.dot_dimension_numbers<[1], [0], [0], [1], [0, 0, 1, 1], [], []>} : vector<16x128xbf16>, vector<128x1024xbf16>, vector<16x1024xf32> -> vector<16x1024xf32>
    %130 = vector.extract_strided_slice %129 {offsets = [0, 0], sizes = [16, 512], strides = [1, 1]} : vector<16x1024xf32> to vector<16x512xf32>
    %131 = vector.extract_strided_slice %129 {offsets = [0, 512], sizes = [16, 512], strides = [1, 1]} : vector<16x1024xf32> to vector<16x512xf32>
    %132 = arith.negf %130 : vector<16x512xf32>
    %133 = math.exp %132 : vector<16x512xf32>
    %cst_42 = arith.constant 1.000000e+00 : f32
    %134 = vector.broadcast %cst_42 : f32 to vector<16x512xf32>
    %135 = arith.addf %134, %133 : vector<16x512xf32>
    %136 = arith.divf %134, %135 : vector<16x512xf32>
    %137 = arith.mulf %130, %136 : vector<16x512xf32>
    %138 = arith.mulf %137, %131 : vector<16x512xf32>
    %139 = arith.truncf %138 : vector<16x512xf32> to vector<16x512xbf16>
    %c0_43 = arith.constant 0 : index
    %c0_44 = arith.constant 0 : index
    %c0_45 = arith.constant 0 : index
    %140 = vector.load %arg11[%c0_43, %c0_44, %c0_45] : memref<1x512x128xbf16, #tpu.memory_space<vmem>>, vector<1x512x128xbf16>
    %141 = vector.shape_cast %140 : vector<1x512x128xbf16> to vector<512x128xbf16>
    %cst_46 = arith.constant dense<0.000000e+00> : vector<16x128xf32>
    %142 = tpu.matmul %139, %141, %cst_46 {dimension_numbers = #tpu.dot_dimension_numbers<[1], [0], [0], [1], [0, 0, 1, 1], [], []>} : vector<16x512xbf16>, vector<512x128xbf16>, vector<16x128xf32> -> vector<16x128xf32>
    %143 = arith.addf %111, %142 : vector<16x128xf32>
    %c0_47 = arith.constant 0 : index
    %c0_48 = arith.constant 0 : index
    %144 = vector.load %arg13[%c0_47, %c0_48] : memref<16x128xf32, #tpu.memory_space<vmem>>, vector<16x128xf32>
    tpu.vector_store %arg13[%c0_47, %c0_48], %143 {strides = array<i32>} : memref<16x128xf32, #tpu.memory_space<vmem>>, vector<16x128xf32>,
    %c1_i32_49 = arith.constant 1 : i32
    %145 = arith.cmpi eq, %arg0, %c1_i32_49 : i32
    %146 = arith.extui %145 : i1 to i32
    %c0_i32_50 = arith.constant 0 : i32
    %147 = arith.cmpi ne, %146, %c0_i32_50 : i32
    scf.if %147 {
      %148 = arith.mulf %143, %143 : vector<16x128xf32>
      %cst_51 = arith.constant dense<0.000000e+00> : vector<16xf32>
      %149 = vector.multi_reduction <add>, %148, %cst_51 [1] : vector<16x128xf32> to vector<16xf32>
      %150 = vector.shape_cast %149 : vector<16xf32> to vector<16x1xf32>
      %cst_52 = arith.constant 1.280000e+02 : f32
      %151 = vector.broadcast %cst_52 : f32 to vector<16x1xf32>
      %152 = arith.divf %150, %151 : vector<16x1xf32>
      %cst_53 = arith.constant 9.99999974E-6 : f32
      %153 = vector.broadcast %cst_53 : f32 to vector<16x1xf32>
      %154 = arith.addf %152, %153 : vector<16x1xf32>
      %155 = math.rsqrt %154 : vector<16x1xf32>
      %156 = vector.broadcast %155 : vector<16x1xf32> to vector<16x128xf32>
      %157 = arith.mulf %143, %156 : vector<16x128xf32>
      %c0_54 = arith.constant 0 : index
      %c0_55 = arith.constant 0 : index
      %158 = vector.load %arg5[%c0_54, %c0_55] : memref<1x128xf32, #tpu.memory_space<vmem>>, vector<1x128xf32>
      %159 = vector.broadcast %158 : vector<1x128xf32> to vector<16x128xf32>
      %160 = arith.mulf %157, %159 : vector<16x128xf32>
      %c0_56 = arith.constant 0 : index
      %c0_57 = arith.constant 0 : index
      %161 = vector.load %arg12[%c0_56, %c0_57] : memref<16x128xf32, #tpu.memory_space<vmem>>, vector<16x128xf32>
      tpu.vector_store %arg12[%c0_56, %c0_57], %160 {strides = array<i32>} : memref<16x128xf32, #tpu.memory_space<vmem>>, vector<16x128xf32>,
    } else {
    }
    return
  }
  func.func @transform_0(%arg0: i32) -> (i32, i32) {
    %c0_i32 = arith.constant 0 : i32
    %c0_i32_0 = arith.constant 0 : i32
    %c0_i32_1 = arith.constant 0 : i32
    return %c0_i32, %c0_i32_0 : i32, i32
  }
  func.func @transform_1(%arg0: i32) -> (i32, i32) {
    %c0_i32 = arith.constant 0 : i32
    %c0_i32_0 = arith.constant 0 : i32
    %c0_i32_1 = arith.constant 0 : i32
    return %c0_i32, %c0_i32_0 : i32, i32
  }
  func.func @transform_2(%arg0: i32) -> (i32, i32) {
    %c0_i32 = arith.constant 0 : i32
    %c0_i32_0 = arith.constant 0 : i32
    %c0_i32_1 = arith.constant 0 : i32
    return %c0_i32, %c0_i32_0 : i32, i32
  }
  func.func @transform_3(%arg0: i32) -> (i32, i32) {
    %c0_i32 = arith.constant 0 : i32
    %c0_i32_0 = arith.constant 0 : i32
    %c0_i32_1 = arith.constant 0 : i32
    return %c0_i32, %c0_i32_0 : i32, i32
  }
  func.func @transform_4(%arg0: i32) -> (i32, i32) {
    %c0_i32 = arith.constant 0 : i32
    %c0_i32_0 = arith.constant 0 : i32
    %c0_i32_1 = arith.constant 0 : i32
    return %c0_i32, %c0_i32_0 : i32, i32
  }
  func.func @transform_5(%arg0: i32) -> (i32, i32, i32) {
    %c0_i32 = arith.constant 0 : i32
    %c0_i32_0 = arith.constant 0 : i32
    %c0_i32_1 = arith.constant 0 : i32
    return %arg0, %c0_i32, %c0_i32_0 : i32, i32, i32
  }
  func.func @transform_6(%arg0: i32) -> (i32, i32, i32) {
    %c0_i32 = arith.constant 0 : i32
    %c0_i32_0 = arith.constant 0 : i32
    %c0_i32_1 = arith.constant 0 : i32
    return %arg0, %c0_i32, %c0_i32_0 : i32, i32, i32
  }
  func.func @transform_7(%arg0: i32) -> (i32, i32, i32) {
    %c0_i32 = arith.constant 0 : i32
    %c0_i32_0 = arith.constant 0 : i32
    %c0_i32_1 = arith.constant 0 : i32
    return %arg0, %c0_i32, %c0_i32_0 : i32, i32, i32
  }
  func.func @transform_8(%arg0: i32) -> (i32, i32, i32) {
    %c0_i32 = arith.constant 0 : i32
    %c0_i32_0 = arith.constant 0 : i32
    %c0_i32_1 = arith.constant 0 : i32
    return %arg0, %c0_i32, %c0_i32_0 : i32, i32, i32
  }
  func.func @transform_9(%arg0: i32) -> (i32, i32, i32) {
    %c0_i32 = arith.constant 0 : i32
    %c0_i32_0 = arith.constant 0 : i32
    %c0_i32_1 = arith.constant 0 : i32
    return %arg0, %c0_i32, %c0_i32_0 : i32, i32, i32
  }
  func.func @transform_10(%arg0: i32) -> (i32, i32, i32) {
    %c0_i32 = arith.constant 0 : i32
    %c0_i32_0 = arith.constant 0 : i32
    %c0_i32_1 = arith.constant 0 : i32
    return %arg0, %c0_i32, %c0_i32_0 : i32, i32, i32
  }
  func.func @transform_11(%arg0: i32) -> (i32, i32) {
    %c0_i32 = arith.constant 0 : i32
    %c0_i32_0 = arith.constant 0 : i32
    %c0_i32_1 = arith.constant 0 : i32
    return %c0_i32, %c0_i32_0 : i32, i32
  }
}

</mosaic_0001>

<llo_original>
// kernel: tpu_custom_call.1
$region0: #{tpu_custom_call.1}
  #allocation0 [shape = 'u32[]', space=smem, size = 0x4, offset = 0x4, fixed_abs, tag = 'smem constant byte address 0x4 - core index']
  #allocation1 [shape = 'u32[144,128]{1,0:T(1,128)}', space=vmem, size = 0x12000, scoped, tag = 'internal scratch']
  #allocation2 [shape = 'f32[16,128]{1,0:T(8,128)}', space=vmem, size = 0x2000, scoped, tag = 'scratch operand']
  %s0 = inlined_call_operand.hbm [shape: f32[16,128], index: 0, kind: input, shape index: {}]
  %s1 = inlined_call_operand.hbm [shape: f32[16,256], index: 1, kind: input, shape index: {}]
  %s2 = inlined_call_operand.hbm [shape: f32[16,256], index: 2, kind: input, shape index: {}]
  %s3 = inlined_call_operand.hbm [shape: f32[16,16], index: 3, kind: input, shape index: {}]
  %s4 = inlined_call_operand.vmem [shape: f32[1,128], index: 4, kind: input, shape index: {}]
  %s5 = inlined_call_operand.vmem [shape: f32[2,1,128], index: 5, kind: input, shape index: {}]
  %s6 = inlined_call_operand.vmem [shape: f32[2,1,128], index: 6, kind: input, shape index: {}]
  %s7 = inlined_call_operand.hbm [shape: bf16[2,128,256], index: 7, kind: input, shape index: {}]
  %s8 = inlined_call_operand.hbm [shape: bf16[2,128,128], index: 8, kind: input, shape index: {}]
  %s9 = inlined_call_operand.hbm [shape: bf16[2,128,1024], index: 9, kind: input, shape index: {}]
  %s10 = inlined_call_operand.hbm [shape: bf16[2,512,128], index: 10, kind: input, shape index: {}]
  %s11 = inlined_call_operand.hbm [shape: f32[16,128], index: 11, kind: output, shape index: {}]
  %s12 = sld [smem:[#allocation0]]
  $region117: #{tpu_custom_call.1} parent=0
    _
  %s14 = ssub.s32 1, %s12
  %s15 = scalar_select 0, %s14, %s12
  $region1: #{tpu_custom_call.1} parent=0
    #allocation3 [shape = 'u8[8192]{0}', space=vmem, size = 0x2000, scoped, tag = 'input window, operand 0, single buffered']
    #allocation4 [shape = 's32[2]{0}', space=sflag, size = 0x8, scoped, tag = 'scoped memory for tpu_custom_call.1']
    #allocation5 [shape = 's32[2]{0}', space=sflag, size = 0x8, scoped, tag = 'scoped memory for tpu_custom_call.1']
    #allocation6 [shape = 'u8[16384]{0}', space=vmem, size = 0x4000, scoped, tag = 'input window, operand 1, single buffered']
    #allocation7 [shape = 's32[1]{0}', space=sflag, size = 0x4, scoped, tag = 'scoped memory for tpu_custom_call.1']
    #allocation8 [shape = 'u8[16384]{0}', space=vmem, size = 0x4000, scoped, tag = 'input window, operand 2, single buffered']
    #allocation9 [shape = 'u8[8192]{0}', space=vmem, size = 0x2000, scoped, tag = 'input window, operand 3, single buffered']
    #allocation10 [shape = 's32[1]{0}', space=sflag, size = 0x4, scoped, tag = 'scoped memory for tpu_custom_call.1']
    #allocation11 [shape = 'u8[131072]{0}', space=vmem, size = 0x20000, scoped, tag = 'input window, operand 7']
    #allocation12 [shape = 'u8[65536]{0}', space=vmem, size = 0x10000, scoped, tag = 'input window, operand 8']
    #allocation13 [shape = 'u8[524288]{0}', space=vmem, size = 0x80000, scoped, tag = 'input window, operand 9']
    #allocation14 [shape = 'u8[262144]{0}', space=vmem, size = 0x40000, scoped, tag = 'input window, operand 10']
    #allocation15 [shape = 'u8[8192]{0}', space=vmem, size = 0x2000, scoped, tag = 'output window, operand 0, single buffered']
    %16 = vsyncpa [#allocation4], 0
    %17 = vsyncpa [#allocation7], 0
    %18 = vsyncpa [#allocation10], 0
    %19 = vsyncpa [#allocation5], 0
    loop: start=0, step=1, limit=4
    $region2: #{tpu_custom_call.1} parent=1 // loop_pre_header
      _
    $region3: #{tpu_custom_call.1} parent=1 // loop_header
      %s21 = sphi 0, %s25
      %p22 = scmp.ge.s32.totalorder %s21, 4
      %s29 = sphi 0, %s29
      %s31 = sphi 0, %s29
      %s32 = sphi 0, %s31
      %s46 = sphi 0, %s32
      %s50 = sphi 0, %s50
      %s52 = sphi 0, %s50
      %s53 = sphi 0, %s52
      %s67 = sphi 0, %s53
      %s71 = sphi 0, %s71
      %s73 = sphi 0, %s71
      %s74 = sphi 0, %s73
      %s88 = sphi 0, %s74
      %s92 = sphi 0, %s92
      %s94 = sphi 0, %s92
      %s95 = sphi 0, %s94
      %s109 = sphi 0, %s95
      %s113 = sphi 0, %s113
      %s115 = sphi 0, %s113
      %s116 = sphi 0, %s115
      %s130 = sphi 0, %s116
      %s136 = sphi 0, %s138
      %s139 = sphi 0, %s136
      %s140 = sphi 0, %s139
      %s156 = sphi 0, %s140
      %s162 = sphi 0, %s164
      %s165 = sphi 0, %s162
      %s166 = sphi 0, %s165
      %s182 = sphi 0, %s166
      %s188 = sphi 0, %s190
      %s191 = sphi 0, %s188
      %s192 = sphi 0, %s191
      %s208 = sphi 0, %s192
      %s214 = sphi 0, %s216
      %s217 = sphi 0, %s214
      %s218 = sphi 0, %s217
      %s234 = sphi 0, %s218
      %s240 = sphi 0, %s242
      %s243 = sphi 0, %s240
      %s244 = sphi 0, %s243
      %s260 = sphi 0, %s244
      %s266 = sphi 0, %s268
      %s269 = sphi 0, %s266
      %s270 = sphi 0, %s269
      %s286 = sphi 0, %s270
      %s290 = sphi 0, %s290
      %s292 = sphi 0, %s290
      %s293 = sphi 0, %s292
      %s307 = sphi 0, %s293
    $region4: #{tpu_custom_call.1} parent=1 // loop_header_branch
      %24 = sbr.rel (%p22) target = $region8
    $region5: #{tpu_custom_call.1} parent=1 // loop_body
      %s26 = ssub.s32 %s21, 1
      %s27 = ssub.s32 %s21, 2
      %s28 = sadd.s32 %s21, 1
      %s30 = sadd.s32 %s29, 1
      %p33 = scmp.eq.s32.totalorder %s21, 1
      %p34 = scmp.ne.s32.totalorder %s29, %s31
      %p35 = scmp.eq.s32.totalorder %s21, 0
      %p36 = por %p34, %p35
      %p37 = scmp.ne.s32.totalorder %s29, %s31
      %p38 = scmp.eq.s32.totalorder %s26, 1
      %p39 = por %p37, %p38
      %p40 = scmp.ne.s32.totalorder %s31, %s32
      %p41 = scmp.eq.s32.totalorder %s26, 0
      %p42 = por %p40, %p41
      %p43 = scmp.ne.s32.totalorder %s31, %s32
      %p44 = scmp.eq.s32.totalorder %s27, 1
      %p45 = por %p43, %p44
      %p47 = scmp.ne.s32.totalorder %s32, %s46
      %p48 = scmp.eq.s32.totalorder %s27, 0
      %p49 = por %p47, %p48
      %s51 = sadd.s32 %s50, 1
      %p54 = scmp.eq.s32.totalorder %s21, 1
      %p55 = scmp.ne.s32.totalorder %s50, %s52
      %p56 = scmp.eq.s32.totalorder %s21, 0
      %p57 = por %p55, %p56
      %p58 = scmp.ne.s32.totalorder %s50, %s52
      %p59 = scmp.eq.s32.totalorder %s26, 1
      %p60 = por %p58, %p59
      %p61 = scmp.ne.s32.totalorder %s52, %s53
      %p62 = scmp.eq.s32.totalorder %s26, 0
      %p63 = por %p61, %p62
      %p64 = scmp.ne.s32.totalorder %s52, %s53
      %p65 = scmp.eq.s32.totalorder %s27, 1
      %p66 = por %p64, %p65
      %p68 = scmp.ne.s32.totalorder %s53, %s67
      %p69 = scmp.eq.s32.totalorder %s27, 0
      %p70 = por %p68, %p69
      %s72 = sadd.s32 %s71, 1
      %p75 = scmp.eq.s32.totalorder %s21, 1
      %p76 = scmp.ne.s32.totalorder %s71, %s73
      %p77 = scmp.eq.s32.totalorder %s21, 0
      %p78 = por %p76, %p77
      %p79 = scmp.ne.s32.totalorder %s71, %s73
      %p80 = scmp.eq.s32.totalorder %s26, 1
      %p81 = por %p79, %p80
      %p82 = scmp.ne.s32.totalorder %s73, %s74
      %p83 = scmp.eq.s32.totalorder %s26, 0
      %p84 = por %p82, %p83
      %p85 = scmp.ne.s32.totalorder %s73, %s74
      %p86 = scmp.eq.s32.totalorder %s27, 1
      %p87 = por %p85, %p86
      %p89 = scmp.ne.s32.totalorder %s74, %s88
      %p90 = scmp.eq.s32.totalorder %s27, 0
      %p91 = por %p89, %p90
      %s93 = sadd.s32 %s92, 1
      %p96 = scmp.eq.s32.totalorder %s21, 1
      %p97 = scmp.ne.s32.totalorder %s92, %s94
      %p98 = scmp.eq.s32.totalorder %s21, 0
      %p99 = por %p97, %p98
      %p100 = scmp.ne.s32.totalorder %s92, %s94
      %p101 = scmp.eq.s32.totalorder %s26, 1
      %p102 = por %p100, %p101
      %p103 = scmp.ne.s32.totalorder %s94, %s95
      %p104 = scmp.eq.s32.totalorder %s26, 0
      %p105 = por %p103, %p104
      %p106 = scmp.ne.s32.totalorder %s94, %s95
      %p107 = scmp.eq.s32.totalorder %s27, 1
      %p108 = por %p106, %p107
      %p110 = scmp.ne.s32.totalorder %s95, %s109
      %p111 = scmp.eq.s32.totalorder %s27, 0
      %p112 = por %p110, %p111
      %s114 = sadd.s32 %s113, 1
      %p117 = scmp.eq.s32.totalorder %s21, 1
      %p118 = scmp.ne.s32.totalorder %s113, %s115
      %p119 = scmp.eq.s32.totalorder %s21, 0
      %p120 = por %p118, %p119
      %p121 = scmp.ne.s32.totalorder %s113, %s115
      %p122 = scmp.eq.s32.totalorder %s26, 1
      %p123 = por %p121, %p122
      %p124 = scmp.ne.s32.totalorder %s115, %s116
      %p125 = scmp.eq.s32.totalorder %s26, 0
      %p126 = por %p124, %p125
      %p127 = scmp.ne.s32.totalorder %s115, %s116
      %p128 = scmp.eq.s32.totalorder %s27, 1
      %p129 = por %p127, %p128
      %p131 = scmp.ne.s32.totalorder %s116, %s130
      %p132 = scmp.eq.s32.totalorder %s27, 0
      %p133 = por %p131, %p132
      %s134 = ssub.s32 %s21, %s28
      %p135 = scmp.eq.s32.totalorder %s134, 0
      %s137 = sadd.s32 %s136, 1
      %s138 = scalar_select %p135, %s136, %s137
      %p141 = pneg %p135
      %p142 = scmp.eq.s32.totalorder %s21, 1
      %p143 = por %p141, %p142
      %p144 = scmp.ne.s32.totalorder %s136, %s139
      %p145 = scmp.eq.s32.totalorder %s21, 0
      %p146 = por %p144, %p145
      %p147 = scmp.ne.s32.totalorder %s136, %s139
      %p148 = scmp.eq.s32.totalorder %s26, 1
      %p149 = por %p147, %p148
      %p150 = scmp.ne.s32.totalorder %s139, %s140
      %p151 = scmp.eq.s32.totalorder %s26, 0
      %p152 = por %p150, %p151
      %p153 = scmp.ne.s32.totalorder %s139, %s140
      %p154 = scmp.eq.s32.totalorder %s27, 1
      %p155 = por %p153, %p154
      %p157 = scmp.ne.s32.totalorder %s140, %s156
      %p158 = scmp.eq.s32.totalorder %s27, 0
      %p159 = por %p157, %p158
      %s160 = ssub.s32 %s21, %s28
      %p161 = scmp.eq.s32.totalorder %s160, 0
      %s163 = sadd.s32 %s162, 1
      %s164 = scalar_select %p161, %s162, %s163
      %p167 = pneg %p161
      %p168 = scmp.eq.s32.totalorder %s21, 1
      %p169 = por %p167, %p168
      %p170 = scmp.ne.s32.totalorder %s162, %s165
      %p171 = scmp.eq.s32.totalorder %s21, 0
      %p172 = por %p170, %p171
      %p173 = scmp.ne.s32.totalorder %s162, %s165
      %p174 = scmp.eq.s32.totalorder %s26, 1
      %p175 = por %p173, %p174
      %p176 = scmp.ne.s32.totalorder %s165, %s166
      %p177 = scmp.eq.s32.totalorder %s26, 0
      %p178 = por %p176, %p177
      %p179 = scmp.ne.s32.totalorder %s165, %s166
      %p180 = scmp.eq.s32.totalorder %s27, 1
      %p181 = por %p179, %p180
      %p183 = scmp.ne.s32.totalorder %s166, %s182
      %p184 = scmp.eq.s32.totalorder %s27, 0
      %p185 = por %p183, %p184
      %s186 = ssub.s32 %s21, %s28
      %p187 = scmp.eq.s32.totalorder %s186, 0
      %s189 = sadd.s32 %s188, 1
      %s190 = scalar_select %p187, %s188, %s189
      %p193 = pneg %p187
      %p194 = scmp.eq.s32.totalorder %s21, 1
      %p195 = por %p193, %p194
      %p196 = scmp.ne.s32.totalorder %s188, %s191
      %p197 = scmp.eq.s32.totalorder %s21, 0
      %p198 = por %p196, %p197
      %p199 = scmp.ne.s32.totalorder %s188, %s191
      %p200 = scmp.eq.s32.totalorder %s26, 1
      %p201 = por %p199, %p200
      %p202 = scmp.ne.s32.totalorder %s191, %s192
      %p203 = scmp.eq.s32.totalorder %s26, 0
      %p204 = por %p202, %p203
      %p205 = scmp.ne.s32.totalorder %s191, %s192
      %p206 = scmp.eq.s32.totalorder %s27, 1
      %p207 = por %p205, %p206
      %p209 = scmp.ne.s32.totalorder %s192, %s208
      %p210 = scmp.eq.s32.totalorder %s27, 0
      %p211 = por %p209, %p210
      %s212 = ssub.s32 %s21, %s28
      %p213 = scmp.eq.s32.totalorder %s212, 0
      %s215 = sadd.s32 %s214, 1
      %s216 = scalar_select %p213, %s214, %s215
      %p219 = pneg %p213
      %p220 = scmp.eq.s32.totalorder %s21, 1
      %p221 = por %p219, %p220
      %p222 = scmp.ne.s32.totalorder %s214, %s217
      %p223 = scmp.eq.s32.totalorder %s21, 0
      %p224 = por %p222, %p223
      %p225 = scmp.ne.s32.totalorder %s214, %s217
      %p226 = scmp.eq.s32.totalorder %s26, 1
      %p227 = por %p225, %p226
      %p228 = scmp.ne.s32.totalorder %s217, %s218
      %p229 = scmp.eq.s32.totalorder %s26, 0
      %p230 = por %p228, %p229
      %p231 = scmp.ne.s32.totalorder %s217, %s218
      %p232 = scmp.eq.s32.totalorder %s27, 1
      %p233 = por %p231, %p232
      %p235 = scmp.ne.s32.totalorder %s218, %s234
      %p236 = scmp.eq.s32.totalorder %s27, 0
      %p237 = por %p235, %p236
      %s238 = ssub.s32 %s21, %s28
      %p239 = scmp.eq.s32.totalorder %s238, 0
      %s241 = sadd.s32 %s240, 1
      %s242 = scalar_select %p239, %s240, %s241
      %p245 = pneg %p239
      %p246 = scmp.eq.s32.totalorder %s21, 1
      %p247 = por %p245, %p246
      %p248 = scmp.ne.s32.totalorder %s240, %s243
      %p249 = scmp.eq.s32.totalorder %s21, 0
      %p250 = por %p248, %p249
      %p251 = scmp.ne.s32.totalorder %s240, %s243
      %p252 = scmp.eq.s32.totalorder %s26, 1
      %p253 = por %p251, %p252
      %p254 = scmp.ne.s32.totalorder %s243, %s244
      %p255 = scmp.eq.s32.totalorder %s26, 0
      %p256 = por %p254, %p255
      %p257 = scmp.ne.s32.totalorder %s243, %s244
      %p258 = scmp.eq.s32.totalorder %s27, 1
      %p259 = por %p257, %p258
      %p261 = scmp.ne.s32.totalorder %s244, %s260
      %p262 = scmp.eq.s32.totalorder %s27, 0
      %p263 = por %p261, %p262
      %s264 = ssub.s32 %s21, %s28
      %p265 = scmp.eq.s32.totalorder %s264, 0
      %s267 = sadd.s32 %s266, 1
      %s268 = scalar_select %p265, %s266, %s267
      %p271 = pneg %p265
      %p272 = scmp.eq.s32.totalorder %s21, 1
      %p273 = por %p271, %p272
      %p274 = scmp.ne.s32.totalorder %s266, %s269
      %p275 = scmp.eq.s32.totalorder %s21, 0
      %p276 = por %p274, %p275
      %p277 = scmp.ne.s32.totalorder %s266, %s269
      %p278 = scmp.eq.s32.totalorder %s26, 1
      %p279 = por %p277, %p278
      %p280 = scmp.ne.s32.totalorder %s269, %s270
      %p281 = scmp.eq.s32.totalorder %s26, 0
      %p282 = por %p280, %p281
      %p283 = scmp.ne.s32.totalorder %s269, %s270
      %p284 = scmp.eq.s32.totalorder %s27, 1
      %p285 = por %p283, %p284
      %p287 = scmp.ne.s32.totalorder %s270, %s286
      %p288 = scmp.eq.s32.totalorder %s27, 0
      %p289 = por %p287, %p288
      %s291 = sadd.s32 %s290, 1
      %p294 = scmp.eq.s32.totalorder %s21, 1
      %p295 = scmp.ne.s32.totalorder %s290, %s292
      %p296 = scmp.eq.s32.totalorder %s21, 0
      %p297 = por %p295, %p296
      %p298 = scmp.ne.s32.totalorder %s290, %s292
      %p299 = scmp.eq.s32.totalorder %s26, 1
      %p300 = por %p298, %p299
      %p301 = scmp.ne.s32.totalorder %s292, %s293
      %p302 = scmp.eq.s32.totalorder %s26, 0
      %p303 = por %p301, %p302
      %p304 = scmp.ne.s32.totalorder %s292, %s293
      %p305 = scmp.eq.s32.totalorder %s27, 1
      %p306 = por %p304, %p305
      %p308 = scmp.ne.s32.totalorder %s293, %s307
      %p309 = scmp.eq.s32.totalorder %s27, 0
      %p310 = por %p308, %p309
      %p311 = scmp.le.s32.totalorder 1, %s21
      %p312 = scmp.lt.s32.totalorder %s21, 3
      %p313 = pnand %p311, %p312
      %p314 = pneg %p313
      // Predicated region
      $region9: #{tpu_custom_call.1} parent=5 // pred_check
        _
      $region10: #{tpu_custom_call.1} parent=5 // pred_check_branch
        %316 = sbr.rel (%p313) target = $region12
      $region11: #{tpu_custom_call.1} parent=5 // pred_region
        %s317 = ssub.s32 %s21, 1
        // Predicated region
        $region13: #{tpu_custom_call.1} parent=11 // pred_check
          %p318 = pneg %p42
        $region14: #{tpu_custom_call.1} parent=11 // pred_check_branch
          %320 = sbr.rel (%p318) target = $region16
        $region15: #{tpu_custom_call.1} parent=11 // pred_region
          %s322 = ssub.s32 256, 256
          %323 = vsyncadd [#allocation4], %s322
          %s324 = sshll.u32 [#allocation3], 4
          %s325 = int_to_ptr.vmem [resolvable:$true] %s324
          %330 = dma.hbm_to_vmem [thread:$0]  %s0, 256, %s325, [#allocation4], 128, 128, 8
        $region16: #{tpu_custom_call.1} parent=11 // pred_fallthru
          _
        // Predicated region
        $region17: #{tpu_custom_call.1} parent=11 // pred_check
          %p331 = pneg %p63
        $region18: #{tpu_custom_call.1} parent=11 // pred_check_branch
          %333 = sbr.rel (%p331) target = $region20
        $region19: #{tpu_custom_call.1} parent=11 // pred_region
          %s335 = ssub.s32 512, 512
          %336 = vsyncadd [#allocation7], %s335
          %s337 = sshll.u32 [#allocation6], 4
          %s338 = int_to_ptr.vmem [resolvable:$true] %s337
          %343 = dma.hbm_to_vmem [thread:$0]  %s1, 512, %s338, [#allocation7], 256, 256, 16
        $region20: #{tpu_custom_call.1} parent=11 // pred_fallthru
          _
        // Predicated region
        $region21: #{tpu_custom_call.1} parent=11 // pred_check
          %p344 = pneg %p84
        $region22: #{tpu_custom_call.1} parent=11 // pred_check_branch
          %346 = sbr.rel (%p344) target = $region24
        $region23: #{tpu_custom_call.1} parent=11 // pred_region
          %s348 = ssub.s32 512, 512
          %349 = vsyncadd [#allocation7], %s348
          %s350 = sshll.u32 [#allocation8], 4
          %s351 = int_to_ptr.vmem [resolvable:$true] %s350
          %356 = dma.hbm_to_vmem [thread:$0]  %s2, 512, %s351, [#allocation7], 256, 256, 16
        $region24: #{tpu_custom_call.1} parent=11 // pred_fallthru
          _
        // Predicated region
        $region25: #{tpu_custom_call.1} parent=11 // pred_check
          %p357 = pneg %p105
        $region26: #{tpu_custom_call.1} parent=11 // pred_check_branch
          %359 = sbr.rel (%p357) target = $region28
        $region27: #{tpu_custom_call.1} parent=11 // pred_region
          %s361 = ssub.s32 256, 256
          %362 = vsyncadd [#allocation10], %s361
          %s363 = sshll.u32 [#allocation9], 4
          %s364 = int_to_ptr.vmem [resolvable:$true] %s363
          %369 = dma.hbm_to_vmem [thread:$0]  %s3, 256, %s364, [#allocation10], 128, 128, 8
        $region28: #{tpu_custom_call.1} parent=11 // pred_fallthru
          _
        // Predicated region
        $region29: #{tpu_custom_call.1} parent=11 // pred_check
          %p370 = pneg %p126
        $region30: #{tpu_custom_call.1} parent=11 // pred_check_branch
          %372 = sbr.rel (%p370) target = $region32
        $region31: #{tpu_custom_call.1} parent=11 // pred_region
          _
        $region32: #{tpu_custom_call.1} parent=11 // pred_fallthru
          _
      $region12: #{tpu_custom_call.1} parent=5 // pred_fallthru
        _
      %p373 = scmp.lt.s32.totalorder %s21, 2
      // Predicated region
      $region33: #{tpu_custom_call.1} parent=5 // pred_check
        %p374 = pneg %p373
      $region34: #{tpu_custom_call.1} parent=5 // pred_check_branch
        %376 = sbr.rel (%p374) target = $region36
      $region35: #{tpu_custom_call.1} parent=5 // pred_region
        // Predicated region
        $region37: #{tpu_custom_call.1} parent=35 // pred_check
          %p377 = pneg %p146
        $region38: #{tpu_custom_call.1} parent=35 // pred_check_branch
          %379 = sbr.rel (%p377) target = $region40
        $region39: #{tpu_custom_call.1} parent=35 // pred_region
          %p380 = scmp.lt.s32.totalorder %s21, 1
          %s381 = scalar_select %p380, %s21, 1
          %s382 = scalar_lea.vmem %s5, %s381
        $region40: #{tpu_custom_call.1} parent=35 // pred_fallthru
          _
        // Predicated region
        $region41: #{tpu_custom_call.1} parent=35 // pred_check
          %p383 = pneg %p172
        $region42: #{tpu_custom_call.1} parent=35 // pred_check_branch
          %385 = sbr.rel (%p383) target = $region44
        $region43: #{tpu_custom_call.1} parent=35 // pred_region
          %p386 = scmp.lt.s32.totalorder %s21, 1
          %s387 = scalar_select %p386, %s21, 1
          %s388 = scalar_lea.vmem %s6, %s387
        $region44: #{tpu_custom_call.1} parent=35 // pred_fallthru
          _
        // Predicated region
        $region45: #{tpu_custom_call.1} parent=35 // pred_check
          %p389 = pneg %p198
        $region46: #{tpu_custom_call.1} parent=35 // pred_check_branch
          %391 = sbr.rel (%p389) target = $region48
        $region47: #{tpu_custom_call.1} parent=35 // pred_region
          %s392 = sand.u32 %s21, 1
          %s393 = scalar_lea.sflag [#allocation4], %s392
          %s394 = sand.u32 %s188, 1
          %s395 = smul.addr %s394, 128
          %s396 = scalar_lea.vmem [#allocation11], %s395
          %s398 = ssub.s32 2048, 2048
          %399 = vsyncadd %s393, %s398
          %s400 = smul.addr %s21, 32
          %s401 = smul.addr %s400, 64
          %s402 = scalar_lea.hbm %s7, %s401
          %s403 = sshll.u32 %s396, 4
          %s404 = int_to_ptr.vmem [resolvable:$true] %s403
          %409 = dma.hbm_to_vmem [thread:$0]  %s402, 2048, %s404, %s393, 128, 128, 8
        $region48: #{tpu_custom_call.1} parent=35 // pred_fallthru
          _
        // Predicated region
        $region49: #{tpu_custom_call.1} parent=35 // pred_check
          %p410 = pneg %p224
        $region50: #{tpu_custom_call.1} parent=35 // pred_check_branch
          %412 = sbr.rel (%p410) target = $region52
        $region51: #{tpu_custom_call.1} parent=35 // pred_region
          %s413 = sand.u32 %s21, 1
          %s414 = scalar_lea.sflag [#allocation4], %s413
          %s415 = sand.u32 %s214, 1
          %s416 = smul.addr %s415, 64
          %s417 = scalar_lea.vmem [#allocation12], %s416
          %s419 = ssub.s32 1024, 1024
          %420 = vsyncadd %s414, %s419
          %s421 = smul.addr %s21, 16
          %s422 = smul.addr %s421, 64
          %s423 = scalar_lea.hbm %s8, %s422
          %s424 = sshll.u32 %s417, 4
          %s425 = int_to_ptr.vmem [resolvable:$true] %s424
          %430 = dma.hbm_to_vmem [thread:$0]  %s423, 1024, %s425, %s414, 64, 64, 4
        $region52: #{tpu_custom_call.1} parent=35 // pred_fallthru
          _
        // Predicated region
        $region53: #{tpu_custom_call.1} parent=35 // pred_check
          %p431 = pneg %p250
        $region54: #{tpu_custom_call.1} parent=35 // pred_check_branch
          %433 = sbr.rel (%p431) target = $region56
        $region55: #{tpu_custom_call.1} parent=35 // pred_region
          %s434 = sand.u32 %s21, 1
          %s435 = scalar_lea.sflag [#allocation4], %s434
          %s436 = sand.u32 %s240, 1
          %s437 = smul.addr %s436, 512
          %s438 = scalar_lea.vmem [#allocation13], %s437
          %s440 = ssub.s32 8192, 8192
          %441 = vsyncadd %s435, %s440
          %s442 = smul.addr %s21, 128
          %s443 = smul.addr %s442, 64
          %s444 = scalar_lea.hbm %s9, %s443
          %s445 = sshll.u32 %s438, 4
          %s446 = int_to_ptr.vmem [resolvable:$true] %s445
          %451 = dma.hbm_to_vmem [thread:$0]  %s444, 8192, %s446, %s435, 512, 512, 32
        $region56: #{tpu_custom_call.1} parent=35 // pred_fallthru
          _
        // Predicated region
        $region57: #{tpu_custom_call.1} parent=35 // pred_check
          %p452 = pneg %p276
        $region58: #{tpu_custom_call.1} parent=35 // pred_check_branch
          %454 = sbr.rel (%p452) target = $region60
        $region59: #{tpu_custom_call.1} parent=35 // pred_region
          %s455 = sand.u32 %s21, 1
          %s456 = scalar_lea.sflag [#allocation4], %s455
          %s457 = sand.u32 %s266, 1
          %s458 = smul.addr %s457, 256
          %s459 = scalar_lea.vmem [#allocation14], %s458
          %s461 = ssub.s32 4096, 4096
          %462 = vsyncadd %s456, %s461
          %s463 = smul.addr %s21, 64
          %s464 = smul.addr %s463, 64
          %s465 = scalar_lea.hbm %s10, %s464
          %s466 = sshll.u32 %s459, 4
          %s467 = int_to_ptr.vmem [resolvable:$true] %s466
          %472 = dma.hbm_to_vmem [thread:$0]  %s465, 4096, %s467, %s456, 64, 64, 4
        $region60: #{tpu_custom_call.1} parent=35 // pred_fallthru
          _
      $region36: #{tpu_custom_call.1} parent=5 // pred_fallthru
        _
      %p473 = scmp.le.s32.totalorder 1, %s21
      %p474 = scmp.lt.s32.totalorder %s21, 3
      %p475 = pnand %p473, %p474
      %p476 = pneg %p475
      // Predicated region
      $region61: #{tpu_custom_call.1} parent=5 // pred_check
        _
      $region62: #{tpu_custom_call.1} parent=5 // pred_check_branch
        %478 = sbr.rel (%p475) target = $region64
      $region63: #{tpu_custom_call.1} parent=5 // pred_region
        %s479 = ssub.s32 %s21, 1
        // Predicated region
        $region65: #{tpu_custom_call.1} parent=63 // pred_check
          %p480 = pneg %p42
        $region66: #{tpu_custom_call.1} parent=63 // pred_check_branch
          %482 = sbr.rel (%p480) target = $region68
        $region67: #{tpu_custom_call.1} parent=63 // pred_region
          %483 = dma.done [#allocation4], 256
        $region68: #{tpu_custom_call.1} parent=63 // pred_fallthru
          _
        // Predicated region
        $region69: #{tpu_custom_call.1} parent=63 // pred_check
          %p484 = pneg %p63
        $region70: #{tpu_custom_call.1} parent=63 // pred_check_branch
          %486 = sbr.rel (%p484) target = $region72
        $region71: #{tpu_custom_call.1} parent=63 // pred_region
          %487 = dma.done [#allocation7], 512
        $region72: #{tpu_custom_call.1} parent=63 // pred_fallthru
          _
        // Predicated region
        $region73: #{tpu_custom_call.1} parent=63 // pred_check
          %p488 = pneg %p84
        $region74: #{tpu_custom_call.1} parent=63 // pred_check_branch
          %490 = sbr.rel (%p488) target = $region76
        $region75: #{tpu_custom_call.1} parent=63 // pred_region
          %491 = dma.done [#allocation7], 512
        $region76: #{tpu_custom_call.1} parent=63 // pred_fallthru
          _
        // Predicated region
        $region77: #{tpu_custom_call.1} parent=63 // pred_check
          %p492 = pneg %p105
        $region78: #{tpu_custom_call.1} parent=63 // pred_check_branch
          %494 = sbr.rel (%p492) target = $region80
        $region79: #{tpu_custom_call.1} parent=63 // pred_region
          %495 = dma.done [#allocation10], 256
        $region80: #{tpu_custom_call.1} parent=63 // pred_fallthru
          _
        %s496 = sand.u32 %s26, 1
        %s497 = scalar_lea.sflag [#allocation4], %s496
        %s498 = sand.u32 %s191, 1
        %s499 = smul.addr %s498, 128
        %s500 = scalar_lea.vmem [#allocation11], %s499
        // Predicated region
        $region81: #{tpu_custom_call.1} parent=63 // pred_check
          %p501 = pneg %p204
        $region82: #{tpu_custom_call.1} parent=63 // pred_check_branch
          %503 = sbr.rel (%p501) target = $region84
        $region83: #{tpu_custom_call.1} parent=63 // pred_region
          %504 = dma.done %s497, 2048
        $region84: #{tpu_custom_call.1} parent=63 // pred_fallthru
          _
        %s505 = sand.u32 %s26, 1
        %s506 = scalar_lea.sflag [#allocation4], %s505
        %s507 = sand.u32 %s217, 1
        %s508 = smul.addr %s507, 64
        %s509 = scalar_lea.vmem [#allocation12], %s508
        // Predicated region
        $region85: #{tpu_custom_call.1} parent=63 // pred_check
          %p510 = pneg %p230
        $region86: #{tpu_custom_call.1} parent=63 // pred_check_branch
          %512 = sbr.rel (%p510) target = $region88
        $region87: #{tpu_custom_call.1} parent=63 // pred_region
          %513 = dma.done %s506, 1024
        $region88: #{tpu_custom_call.1} parent=63 // pred_fallthru
          _
        %s514 = sand.u32 %s26, 1
        %s515 = scalar_lea.sflag [#allocation4], %s514
        %s516 = sand.u32 %s243, 1
        %s517 = smul.addr %s516, 512
        %s518 = scalar_lea.vmem [#allocation13], %s517
        // Predicated region
        $region89: #{tpu_custom_call.1} parent=63 // pred_check
          %p519 = pneg %p256
        $region90: #{tpu_custom_call.1} parent=63 // pred_check_branch
          %521 = sbr.rel (%p519) target = $region92
        $region91: #{tpu_custom_call.1} parent=63 // pred_region
          %522 = dma.done %s515, 8192
        $region92: #{tpu_custom_call.1} parent=63 // pred_fallthru
          _
        %s523 = sand.u32 %s26, 1
        %s524 = scalar_lea.sflag [#allocation4], %s523
        %s525 = sand.u32 %s269, 1
        %s526 = smul.addr %s525, 256
        %s527 = scalar_lea.vmem [#allocation14], %s526
        // Predicated region
        $region93: #{tpu_custom_call.1} parent=63 // pred_check
          %p528 = pneg %p282
        $region94: #{tpu_custom_call.1} parent=63 // pred_check_branch
          %530 = sbr.rel (%p528) target = $region96
        $region95: #{tpu_custom_call.1} parent=63 // pred_region
          %531 = dma.done %s524, 4096
        $region96: #{tpu_custom_call.1} parent=63 // pred_fallthru
          _
        %p532 = pneg %p42
        %p533 = pneg %p39
        %p534 = pneg %p63
        %p535 = pneg %p60
        %p536 = pneg %p84
        %p537 = pneg %p81
        %p538 = pneg %p105
        %p539 = pneg %p102
        %p540 = pneg %p126
        %p541 = pneg %p123
        %p542 = scmp.lt.s32.totalorder %s26, 1
        %s543 = scalar_select %p542, %s26, 1
        %s544 = scalar_lea.vmem %s5, %s543
        %p545 = pneg %p152
        %p546 = pneg %p149
        %p547 = scmp.lt.s32.totalorder %s26, 1
        %s548 = scalar_select %p547, %s26, 1
        %s549 = scalar_lea.vmem %s6, %s548
        %p550 = pneg %p178
        %p551 = pneg %p175
        %s552 = sand.u32 %s26, 1
        %s553 = scalar_lea.sflag [#allocation4], %s552
        %s554 = sand.u32 %s191, 1
        %s555 = smul.addr %s554, 128
        %s556 = scalar_lea.vmem [#allocation11], %s555
        %p557 = pneg %p204
        %p558 = pneg %p201
        %s559 = sand.u32 %s26, 1
        %s560 = scalar_lea.sflag [#allocation4], %s559
        %s561 = sand.u32 %s217, 1
        %s562 = smul.addr %s561, 64
        %s563 = scalar_lea.vmem [#allocation12], %s562
        %p564 = pneg %p230
        %p565 = pneg %p227
        %s566 = sand.u32 %s26, 1
        %s567 = scalar_lea.sflag [#allocation4], %s566
        %s568 = sand.u32 %s243, 1
        %s569 = smul.addr %s568, 512
        %s570 = scalar_lea.vmem [#allocation13], %s569
        %p571 = pneg %p256
        %p572 = pneg %p253
        %s573 = sand.u32 %s26, 1
        %s574 = scalar_lea.sflag [#allocation4], %s573
        %s575 = sand.u32 %s269, 1
        %s576 = smul.addr %s575, 256
        %s577 = scalar_lea.vmem [#allocation14], %s576
        %p578 = pneg %p282
        %p579 = pneg %p279
        %p580 = pneg %p303
        %p581 = pneg %p300
        %p582 = scmp.lt.s32.totalorder %s26, 1
        %s583 = scalar_select %p582, %s26, 1
        %s584 = scalar_lea.vmem %s5, %s583
        %p585 = scmp.lt.s32.totalorder %s26, 1
        %s586 = scalar_select %p585, %s26, 1
        %s587 = scalar_lea.vmem %s6, %s586
        %p589 = scmp.eq.s32.totalorder %s26, 0
        // Predicated region
        $region97: #{tpu_custom_call.1} parent=63 // pred_check
          %p590 = pneg %p589
        $region98: #{tpu_custom_call.1} parent=63 // pred_check_branch
          %592 = sbr.rel (%p590) target = $region100
        $region99: #{tpu_custom_call.1} parent=63 // pred_region
          %v593 = vld [vmem:[#allocation3] sm:$0xff]
          %v594 = vld [vmem:[#allocation3 + $0x8] sm:$0xff]
          %595 = vst [vmem:[#allocation2] sm:$0xff] %v593
          %596 = vst [vmem:[#allocation2 + $0x8] sm:$0xff] %v594
        $region100: #{tpu_custom_call.1} parent=63 // pred_fallthru
          _
        %v597 = vld [vmem:[#allocation2] sm:$0xff]
        %v598 = vld [vmem:[#allocation2 + $0x8] sm:$0xff]
        %v599 = vmul.f32 %v597, %v597
        %v600 = vmul.f32 %v598, %v598
        %601 = vadd.xlane.f32.xlu0 %v599
        %v602 = vpop.xlane.xlu0 %601
        %603 = vadd.xlane.f32.xlu0 %v600
        %v604 = vpop.xlane.xlu0 %603
        %v605 = vrcp.pop 128.0
        %v606 = vmul.f32 %v602, %v605
        %v607 = vmul.f32 %v604, %v605
        %v608 = vadd.f32 %v606, 1e-05
        %v609 = vadd.f32 %v607, 1e-05
        %v610 = vrsqrt.pop %v608
        %v611 = vrsqrt.pop %v609
        %v612 = vmul.f32 %v597, %v610
        %v613 = vmul.f32 %v598, %v611
        %v614 = vld [vmem:[%s584] sm:$0x1]
        %v616 = vlaneseq
        %v617 = vshrl.u32 %v616, 7
        %v618 = vsub.s32 0, %v617
        %v619 = vrot.slane %v614, %v618
        %v621 = vmul.f32 %v612, %v619
        %v622 = vmul.f32 %v613, %v619
        %v623 = vpack.c.bf16 %v622, %v621
        %v624 = vld [vmem:[%s500] sm:$0xff]
        %v625 = vld [vmem:[%s500 + $0x8] sm:$0xff]
        %v626 = vld [vmem:[%s500 + $0x10] sm:$0xff]
        %v627 = vld [vmem:[%s500 + $0x18] sm:$0xff]
        %v628 = vld [vmem:[%s500 + $0x20] sm:$0xff]
        %v629 = vld [vmem:[%s500 + $0x28] sm:$0xff]
        %v630 = vld [vmem:[%s500 + $0x30] sm:$0xff]
        %v631 = vld [vmem:[%s500 + $0x38] sm:$0xff]
        %v632 = vld [vmem:[%s500 + $0x40] sm:$0xff]
        %v633 = vld [vmem:[%s500 + $0x48] sm:$0xff]
        %v634 = vld [vmem:[%s500 + $0x50] sm:$0xff]
        %v635 = vld [vmem:[%s500 + $0x58] sm:$0xff]
        %v636 = vld [vmem:[%s500 + $0x60] sm:$0xff]
        %v637 = vld [vmem:[%s500 + $0x68] sm:$0xff]
        %v638 = vld [vmem:[%s500 + $0x70] sm:$0xff]
        %v639 = vld [vmem:[%s500 + $0x78] sm:$0xff]
        %v656 = vunpack.c.l.b16 %v624
        %v657 = vunpack.c.h.b16 %v624
        %v658 = vunpack.c.l.b16 %v625
        %v659 = vunpack.c.h.b16 %v625
        %v660 = vunpack.c.l.b16 %v626
        %v661 = vunpack.c.h.b16 %v626
        %v662 = vunpack.c.l.b16 %v627
        %v663 = vunpack.c.h.b16 %v627
        %v664 = vunpack.c.l.b16 %v628
        %v665 = vunpack.c.h.b16 %v628
        %v666 = vunpack.c.l.b16 %v629
        %v667 = vunpack.c.h.b16 %v629
        %v668 = vunpack.c.l.b16 %v630
        %v669 = vunpack.c.h.b16 %v630
        %v670 = vunpack.c.l.b16 %v631
        %v671 = vunpack.c.h.b16 %v631
        %v672 = vunpack.c.l.b16 %v632
        %v673 = vunpack.c.h.b16 %v632
        %v674 = vunpack.c.l.b16 %v633
        %v675 = vunpack.c.h.b16 %v633
        %v676 = vunpack.c.l.b16 %v634
        %v677 = vunpack.c.h.b16 %v634
        %v678 = vunpack.c.l.b16 %v635
        %v679 = vunpack.c.h.b16 %v635
        %v680 = vunpack.c.l.b16 %v636
        %v681 = vunpack.c.h.b16 %v636
        %v682 = vunpack.c.l.b16 %v637
        %v683 = vunpack.c.h.b16 %v637
        %v684 = vunpack.c.l.b16 %v638
        %v685 = vunpack.c.h.b16 %v638
        %v686 = vunpack.c.l.b16 %v639
        %v687 = vunpack.c.h.b16 %v639
        %v688 = vpack.c.b16 %v658, %v656
        %v689 = vpack.c.b16 %v659, %v657
        %v690 = vpack.c.b16 %v662, %v660
        %v691 = vpack.c.b16 %v663, %v661
        %v692 = vpack.c.b16 %v666, %v664
        %v693 = vpack.c.b16 %v667, %v665
        %v694 = vpack.c.b16 %v670, %v668
        %v695 = vpack.c.b16 %v671, %v669
        %v696 = vpack.c.b16 %v674, %v672
        %v697 = vpack.c.b16 %v675, %v673
        %v698 = vpack.c.b16 %v678, %v676
        %v699 = vpack.c.b16 %v679, %v677
        %v700 = vpack.c.b16 %v682, %v680
        %v701 = vpack.c.b16 %v683, %v681
        %v702 = vpack.c.b16 %v686, %v684
        %v703 = vpack.c.b16 %v687, %v685
        %720 = vmatprep.subr.bf16.mxu0 %v689
        %721 = vmatpush1.bf16.msra.mxu0 %v688
        %722 = vmatprep.subr.bf16.mxu0 %v691
        %723 = vmatpush1.bf16.msra.mxu0 %v690
        %724 = vmatprep.subr.bf16.mxu0 %v693
        %725 = vmatpush1.bf16.msra.mxu0 %v692
        %726 = vmatprep.subr.bf16.mxu0 %v695
        %727 = vmatpush1.bf16.msra.mxu0 %v694
        %728 = vmatprep.subr.bf16.mxu0 %v697
        %729 = vmatpush1.bf16.msra.mxu0 %v696
        %730 = vmatprep.subr.bf16.mxu0 %v699
        %731 = vmatpush1.bf16.msra.mxu0 %v698
        %732 = vmatprep.subr.bf16.mxu0 %v701
        %733 = vmatpush1.bf16.msra.mxu0 %v700
        %734 = vmatprep.subr.bf16.mxu0 %v703
        %735 = vmatpush1.bf16.msra.mxu0 %v702
        %736 = vmatprep.subr.bf16.mxu0 0
        %737 = vmatpush1.bf16.msra.mxu0 0
        %738 = vmatprep.subr.bf16.mxu0 0
        %739 = vmatpush1.bf16.msra.mxu0 0
        %740 = vmatprep.subr.bf16.mxu0 0
        %741 = vmatpush1.bf16.msra.mxu0 0
        %742 = vmatprep.subr.bf16.mxu0 0
        %743 = vmatpush1.bf16.msra.mxu0 0
        %744 = vmatprep.subr.bf16.mxu0 0
        %745 = vmatpush1.bf16.msra.mxu0 0
        %746 = vmatprep.subr.bf16.mxu0 0
        %747 = vmatpush1.bf16.msra.mxu0 0
        %748 = vmatprep.subr.bf16.mxu0 0
        %749 = vmatpush1.bf16.msra.mxu0 0
        %750 = vmatprep.subr.bf16.mxu0 0
        %751 = vmatpush1.bf16.msra.mxu0 0
        %752 = vmatprep.mubr.bf16.mxu0 0
        %753 = vmatmul.mubr.bf16.gmra.mrb[0].mxu0 %v623
        %v754 = vpop.f32.mrb[0].mxu0
        %v755 = vadd.f32 0.0, %v754
        %v756 = vpop.f32.mrb[0].mxu0
        %v757 = vadd.f32 0.0, %v756
        %v758 = vpop.f32.mrb[0].mxu0
        %v759 = vadd.f32 0.0, %v758
        %v760 = vpop.f32.mrb[0].mxu0
        %v761 = vadd.f32 0.0, %v760
        %762 = vdwg.mxu0
        %v763 = vlaneseq
        %v764 = vand.u32 %v763, 127
        %v765 = vadd.s32 %v764, 128
        %vm766 = vcmp.lt.s32.totalorder %v764, 0
        %v767 = vsub.s32 0, %v764
        %v768 = vsel %vm766, %v767, %v764
        %v769 = vshrl.u32 %v768, 1
        %v770 = vand.u32 %v768, 1
        %v771 = vsub.s32 0, %v770
        %v772 = vsel %vm766, %v771, %v770
        %vm773 = vcmp.lt.s32.totalorder %v765, 0
        %v774 = vsub.s32 0, %v765
        %v775 = vsel %vm773, %v774, %v765
        %v776 = vshrl.u32 %v775, 1
        %v777 = vand.u32 %v775, 1
        %v778 = vsub.s32 0, %v777
        %v779 = vsel %vm773, %v778, %v777
        %vm780 = vcmp.ne.s32.totalorder %v772, 0
        %vm781 = vcmp.ne.s32.totalorder %v779, 0
        %vm782 = vcmp.lt.s32.totalorder %v772, 0
        %vm783 = vcmp.lt.s32.totalorder %v779, 0
        %vm784 = vmand %vm782, %vm780
        %vm785 = vmand %vm783, %vm781
        %v786 = vadd.s32 %v772, 2
        %v787 = vadd.s32 %v779, 2
        %v788 = vsel %vm784, %v786, %v772
        %v789 = vsel %vm785, %v787, %v779
        %vm790 = vcmp.eq.s32.totalorder %v788, 0
        %vm791 = vcmp.eq.s32.totalorder %v789, 0
        %792 = vrot.lane.b32.xlu0 %v755, 127
        %v793 = vpop.permute.xlu0 %792
        %794 = vrot.lane.b32.xlu0 %v759, 127
        %v795 = vpop.permute.xlu0 %794
        %796 = vrot.lane.b32.xlu0 %v757, 127
        %v797 = vpop.permute.xlu0 %796
        %798 = vrot.lane.b32.xlu0 %v761, 127
        %v799 = vpop.permute.xlu0 %798
        %vm800 = vcmp.lt.s32.totalorder %v764, 127
        %v801 = vsel %vm800, %v793, %v797
        %v802 = vsel %vm800, %v795, %v799
        %v803 = vsel %vm800, %v797, %v793
        %v804 = vsel %vm800, %v799, %v795
        %805 = vrot.lane.b32.xlu0 %v755, 1
        %v806 = vpop.permute.xlu0 %805
        %807 = vrot.lane.b32.xlu0 %v759, 1
        %v808 = vpop.permute.xlu0 %807
        %809 = vrot.lane.b32.xlu0 %v757, 1
        %v810 = vpop.permute.xlu0 %809
        %811 = vrot.lane.b32.xlu0 %v761, 1
        %v812 = vpop.permute.xlu0 %811
        %vm813 = vcmp.lt.s32.totalorder %v764, 1
        %v814 = vsel %vm813, %v806, %v810
        %v815 = vsel %vm813, %v808, %v812
        %v816 = vsel %vm813, %v810, %v806
        %v817 = vsel %vm813, %v812, %v808
        %v818 = vsel %vm790, %v801, %v816
        %v819 = vsel %vm791, %v803, %v814
        %v820 = vsel %vm790, %v802, %v817
        %v821 = vsel %vm791, %v804, %v815
        %v822 = vld [vmem:[#allocation6] sm:$0xff]
        %v823 = vld [vmem:[#allocation6 + $0x8] sm:$0xff]
        %v824 = vld [vmem:[#allocation6 + $0x10] sm:$0xff]
        %v825 = vld [vmem:[#allocation6 + $0x18] sm:$0xff]
        %v826 = vmul.f32 %v755, %v822
        %v827 = vmul.f32 %v757, %v823
        %v828 = vmul.f32 %v759, %v824
        %v829 = vmul.f32 %v761, %v825
        %v830 = vld [vmem:[#allocation8] sm:$0xff]
        %v831 = vld [vmem:[#allocation8 + $0x8] sm:$0xff]
        %v832 = vld [vmem:[#allocation8 + $0x10] sm:$0xff]
        %v833 = vld [vmem:[#allocation8 + $0x18] sm:$0xff]
        %v834 = vmul.f32 %v818, %v830
        %v835 = vmul.f32 %v819, %v831
        %v836 = vmul.f32 %v820, %v832
        %v837 = vmul.f32 %v821, %v833
        %v838 = vadd.f32 %v826, %v834
        %v839 = vadd.f32 %v827, %v835
        %v840 = vadd.f32 %v828, %v836
        %v841 = vadd.f32 %v829, %v837
        %844 = vrot.lane.b32.xlu0 %v838, 96
        %v845 = vpop.permute.xlu0 %844
        %846 = vrot.lane.b32.xlu0 %v840, 96
        %v847 = vpop.permute.xlu0 %846
        %850 = vrot.lane.b32.xlu0 %v838, 64
        %v851 = vpop.permute.xlu0 %850
        %852 = vrot.lane.b32.xlu0 %v840, 64
        %v853 = vpop.permute.xlu0 %852
        %856 = vrot.lane.b32.xlu0 %v838, 32
        %v857 = vpop.permute.xlu0 %856
        %858 = vrot.lane.b32.xlu0 %v840, 32
        %v859 = vpop.permute.xlu0 %858
        %864 = vrot.lane.b32.xlu0 %v839, 96
        %v865 = vpop.permute.xlu0 %864
        %866 = vrot.lane.b32.xlu0 %v841, 96
        %v867 = vpop.permute.xlu0 %866
        %v870 = vmul.f32 %v838, 0.17677669
        %v871 = vmul.f32 %v840, 0.17677669
        %v872 = vmul.f32 %v845, 0.17677669
        %v873 = vmul.f32 %v847, 0.17677669
        %v874 = vmul.f32 %v851, 0.17677669
        %v875 = vmul.f32 %v853, 0.17677669
        %v876 = vmul.f32 %v857, 0.17677669
        %v877 = vmul.f32 %v859, 0.17677669
        %v878 = vpack.c.bf16 %v871, %v870
        %v879 = vpack.c.bf16 %v873, %v872
        %v880 = vpack.c.bf16 %v875, %v874
        %v881 = vpack.c.bf16 %v877, %v876
        %v882 = vpack.c.bf16 %v841, %v839
        %v883 = vpack.c.bf16 %v867, %v865
        %v884 = vld [vmem:[#allocation9] sm:$0xff]
        %v885 = vld [vmem:[#allocation9 + $0x8] sm:$0xff]
        %vm886 = vcmask 261120
        %v888 = vsel %vm886, %v878, 0
        %v891 = vsel %vm886, %v882, 0
        %893 = vmatprep.subr.bf16.mxu0 0
        %894 = vmatpush1.bf16.xpose.msra.mxu0 %v891
        %895 = vmatprep.subr.bf16.mxu0 0
        %896 = vmatpush1.bf16.xpose.msra.mxu0 0
        %897 = vmatprep.subr.bf16.mxu0 0
        %898 = vmatpush1.bf16.xpose.msra.mxu0 0
        %899 = vmatprep.subr.bf16.mxu0 0
        %900 = vmatpush1.bf16.xpose.msra.mxu0 0
        %901 = vmatprep.subr.bf16.mxu0 0
        %902 = vmatpush1.bf16.xpose.msra.mxu0 0
        %903 = vmatprep.subr.bf16.mxu0 0
        %904 = vmatpush1.bf16.xpose.msra.mxu0 0
        %905 = vmatprep.subr.bf16.mxu0 0
        %906 = vmatpush1.bf16.xpose.msra.mxu0 0
        %907 = vmatprep.subr.bf16.mxu0 0
        %908 = vmatpush1.bf16.xpose.msra.mxu0 0
        %909 = vmatprep.subr.bf16.mxu0 0
        %910 = vmatpush1.bf16.xpose.msra.mxu0 0
        %911 = vmatprep.subr.bf16.mxu0 0
        %912 = vmatpush1.bf16.xpose.msra.mxu0 0
        %913 = vmatprep.subr.bf16.mxu0 0
        %914 = vmatpush1.bf16.xpose.msra.mxu0 0
        %915 = vmatprep.subr.bf16.mxu0 0
        %916 = vmatpush1.bf16.xpose.msra.mxu0 0
        %917 = vmatprep.subr.bf16.mxu0 0
        %918 = vmatpush1.bf16.xpose.msra.mxu0 0
        %919 = vmatprep.subr.bf16.mxu0 0
        %920 = vmatpush1.bf16.xpose.msra.mxu0 0
        %921 = vmatprep.subr.bf16.mxu0 0
        %922 = vmatpush1.bf16.xpose.msra.mxu0 0
        %923 = vmatprep.subr.bf16.mxu0 0
        %924 = vmatpush1.bf16.xpose.msra.mxu0 0
        %925 = vmatprep.mubr.bf16.mxu0 0
        %926 = vmatmul.mubr.bf16.gmra.mrb[0].mxu0 %v888
        %v927 = vpop.f32.mrb[0].mxu0
        %v928 = vadd.f32 %v884, %v927
        %v929 = vpop.f32.mrb[0].mxu0
        %v930 = vpop.f32.mrb[0].mxu0
        %v931 = vadd.f32 %v885, %v930
        %v932 = vpop.f32.mrb[0].mxu0
        %933 = vdwg.mxu0
        %v935 = vsel %vm886, %v879, 0
        %937 = vmatprep.subr.bf16.mxu0 0
        %938 = vmatpush1.bf16.xpose.msra.mxu0 %v891
        %939 = vmatprep.subr.bf16.mxu0 0
        %940 = vmatpush1.bf16.xpose.msra.mxu0 0
        %941 = vmatprep.subr.bf16.mxu0 0
        %942 = vmatpush1.bf16.xpose.msra.mxu0 0
        %943 = vmatprep.subr.bf16.mxu0 0
        %944 = vmatpush1.bf16.xpose.msra.mxu0 0
        %945 = vmatprep.subr.bf16.mxu0 0
        %946 = vmatpush1.bf16.xpose.msra.mxu0 0
        %947 = vmatprep.subr.bf16.mxu0 0
        %948 = vmatpush1.bf16.xpose.msra.mxu0 0
        %949 = vmatprep.subr.bf16.mxu0 0
        %950 = vmatpush1.bf16.xpose.msra.mxu0 0
        %951 = vmatprep.subr.bf16.mxu0 0
        %952 = vmatpush1.bf16.xpose.msra.mxu0 0
        %953 = vmatprep.subr.bf16.mxu0 0
        %954 = vmatpush1.bf16.xpose.msra.mxu0 0
        %955 = vmatprep.subr.bf16.mxu0 0
        %956 = vmatpush1.bf16.xpose.msra.mxu0 0
        %957 = vmatprep.subr.bf16.mxu0 0
        %958 = vmatpush1.bf16.xpose.msra.mxu0 0
        %959 = vmatprep.subr.bf16.mxu0 0
        %960 = vmatpush1.bf16.xpose.msra.mxu0 0
        %961 = vmatprep.subr.bf16.mxu0 0
        %962 = vmatpush1.bf16.xpose.msra.mxu0 0
        %963 = vmatprep.subr.bf16.mxu0 0
        %964 = vmatpush1.bf16.xpose.msra.mxu0 0
        %965 = vmatprep.subr.bf16.mxu0 0
        %966 = vmatpush1.bf16.xpose.msra.mxu0 0
        %967 = vmatprep.subr.bf16.mxu0 0
        %968 = vmatpush1.bf16.xpose.msra.mxu0 0
        %969 = vmatprep.mubr.bf16.mxu0 0
        %970 = vmatmul.mubr.bf16.gmra.mrb[0].mxu0 %v935
        %v971 = vpop.f32.mrb[0].mxu0
        %v972 = vadd.f32 %v884, %v971
        %v973 = vpop.f32.mrb[0].mxu0
        %v974 = vpop.f32.mrb[0].mxu0
        %v975 = vadd.f32 %v885, %v974
        %v976 = vpop.f32.mrb[0].mxu0
        %977 = vdwg.mxu0
        %v979 = vsel %vm886, %v880, 0
        %v982 = vsel %vm886, %v883, 0
        %984 = vmatprep.subr.bf16.mxu0 0
        %985 = vmatpush1.bf16.xpose.msra.mxu0 %v982
        %986 = vmatprep.subr.bf16.mxu0 0
        %987 = vmatpush1.bf16.xpose.msra.mxu0 0
        %988 = vmatprep.subr.bf16.mxu0 0
        %989 = vmatpush1.bf16.xpose.msra.mxu0 0
        %990 = vmatprep.subr.bf16.mxu0 0
        %991 = vmatpush1.bf16.xpose.msra.mxu0 0
        %992 = vmatprep.subr.bf16.mxu0 0
        %993 = vmatpush1.bf16.xpose.msra.mxu0 0
        %994 = vmatprep.subr.bf16.mxu0 0
        %995 = vmatpush1.bf16.xpose.msra.mxu0 0
        %996 = vmatprep.subr.bf16.mxu0 0
        %997 = vmatpush1.bf16.xpose.msra.mxu0 0
        %998 = vmatprep.subr.bf16.mxu0 0
        %999 = vmatpush1.bf16.xpose.msra.mxu0 0
        %1000 = vmatprep.subr.bf16.mxu0 0
        %1001 = vmatpush1.bf16.xpose.msra.mxu0 0
        %1002 = vmatprep.subr.bf16.mxu0 0
        %1003 = vmatpush1.bf16.xpose.msra.mxu0 0
        %1004 = vmatprep.subr.bf16.mxu0 0
        %1005 = vmatpush1.bf16.xpose.msra.mxu0 0
        %1006 = vmatprep.subr.bf16.mxu0 0
        %1007 = vmatpush1.bf16.xpose.msra.mxu0 0
        %1008 = vmatprep.subr.bf16.mxu0 0
        %1009 = vmatpush1.bf16.xpose.msra.mxu0 0
        %1010 = vmatprep.subr.bf16.mxu0 0
        %1011 = vmatpush1.bf16.xpose.msra.mxu0 0
        %1012 = vmatprep.subr.bf16.mxu0 0
        %1013 = vmatpush1.bf16.xpose.msra.mxu0 0
        %1014 = vmatprep.subr.bf16.mxu0 0
        %1015 = vmatpush1.bf16.xpose.msra.mxu0 0
        %1016 = vmatprep.mubr.bf16.mxu0 0
        %1017 = vmatmul.mubr.bf16.gmra.mrb[0].mxu0 %v979
        %v1018 = vpop.f32.mrb[0].mxu0
        %v1019 = vadd.f32 %v884, %v1018
        %v1020 = vpop.f32.mrb[0].mxu0
        %v1021 = vpop.f32.mrb[0].mxu0
        %v1022 = vadd.f32 %v885, %v1021
        %v1023 = vpop.f32.mrb[0].mxu0
        %1024 = vdwg.mxu0
        %v1026 = vsel %vm886, %v881, 0
        %1028 = vmatprep.subr.bf16.mxu0 0
        %1029 = vmatpush1.bf16.xpose.msra.mxu0 %v982
        %1030 = vmatprep.subr.bf16.mxu0 0
        %1031 = vmatpush1.bf16.xpose.msra.mxu0 0
        %1032 = vmatprep.subr.bf16.mxu0 0
        %1033 = vmatpush1.bf16.xpose.msra.mxu0 0
        %1034 = vmatprep.subr.bf16.mxu0 0
        %1035 = vmatpush1.bf16.xpose.msra.mxu0 0
        %1036 = vmatprep.subr.bf16.mxu0 0
        %1037 = vmatpush1.bf16.xpose.msra.mxu0 0
        %1038 = vmatprep.subr.bf16.mxu0 0
        %1039 = vmatpush1.bf16.xpose.msra.mxu0 0
        %1040 = vmatprep.subr.bf16.mxu0 0
        %1041 = vmatpush1.bf16.xpose.msra.mxu0 0
        %1042 = vmatprep.subr.bf16.mxu0 0
        %1043 = vmatpush1.bf16.xpose.msra.mxu0 0
        %1044 = vmatprep.subr.bf16.mxu0 0
        %1045 = vmatpush1.bf16.xpose.msra.mxu0 0
        %1046 = vmatprep.subr.bf16.mxu0 0
        %1047 = vmatpush1.bf16.xpose.msra.mxu0 0
        %1048 = vmatprep.subr.bf16.mxu0 0
        %1049 = vmatpush1.bf16.xpose.msra.mxu0 0
        %1050 = vmatprep.subr.bf16.mxu0 0
        %1051 = vmatpush1.bf16.xpose.msra.mxu0 0
        %1052 = vmatprep.subr.bf16.mxu0 0
        %1053 = vmatpush1.bf16.xpose.msra.mxu0 0
        %1054 = vmatprep.subr.bf16.mxu0 0
        %1055 = vmatpush1.bf16.xpose.msra.mxu0 0
        %1056 = vmatprep.subr.bf16.mxu0 0
        %1057 = vmatpush1.bf16.xpose.msra.mxu0 0
        %1058 = vmatprep.subr.bf16.mxu0 0
        %1059 = vmatpush1.bf16.xpose.msra.mxu0 0
        %1060 = vmatprep.mubr.bf16.mxu0 0
        %1061 = vmatmul.mubr.bf16.gmra.mrb[0].mxu0 %v1026
        %v1062 = vpop.f32.mrb[0].mxu0
        %v1063 = vadd.f32 %v884, %v1062
        %v1064 = vpop.f32.mrb[0].mxu0
        %v1065 = vpop.f32.mrb[0].mxu0
        %v1066 = vadd.f32 %v885, %v1065
        %v1067 = vpop.f32.mrb[0].mxu0
        %1068 = vdwg.mxu0
        %vm1069 = vcmask 130048
        %v1070 = vsel %vm1069, %v928, -inf
        %1071 = vmax.xlane.f32.xlu0 %v1070
        %v1072 = vpop.xlane.xlu0 %1071
        %v1073 = vsel %vm1069, %v931, -inf
        %1074 = vmax.xlane.f32.xlu0 %v1073
        %v1075 = vpop.xlane.xlu0 %1074
        %v1076 = vsel %vm1069, %v972, -inf
        %1077 = vmax.xlane.f32.xlu0 %v1076
        %v1078 = vpop.xlane.xlu0 %1077
        %v1079 = vsel %vm1069, %v975, -inf
        %1080 = vmax.xlane.f32.xlu0 %v1079
        %v1081 = vpop.xlane.xlu0 %1080
        %v1082 = vsel %vm1069, %v1019, -inf
        %1083 = vmax.xlane.f32.xlu0 %v1082
        %v1084 = vpop.xlane.xlu0 %1083
        %v1085 = vsel %vm1069, %v1022, -inf
        %1086 = vmax.xlane.f32.xlu0 %v1085
        %v1087 = vpop.xlane.xlu0 %1086
        %v1088 = vsel %vm1069, %v1063, -inf
        %1089 = vmax.xlane.f32.xlu0 %v1088
        %v1090 = vpop.xlane.xlu0 %1089
        %v1091 = vsel %vm1069, %v1066, -inf
        %1092 = vmax.xlane.f32.xlu0 %v1091
        %v1093 = vpop.xlane.xlu0 %1092
        %v1094 = vsub.f32 %v928, %v1072
        %v1095 = vsub.f32 %v931, %v1075
        %v1096 = vsub.f32 %v972, %v1078
        %v1097 = vsub.f32 %v975, %v1081
        %v1098 = vsub.f32 %v1019, %v1084
        %v1099 = vsub.f32 %v1022, %v1087
        %v1100 = vsub.f32 %v1063, %v1090
        %v1101 = vsub.f32 %v1066, %v1093
        %v1102 = vmul.f32 %v1094, 1.442695
        %v1103 = vpow.pop %v1102
        %v1104 = vmul.f32 %v1095, 1.442695
        %v1105 = vpow.pop %v1104
        %v1106 = vmul.f32 %v1096, 1.442695
        %v1107 = vpow.pop %v1106
        %v1108 = vmul.f32 %v1097, 1.442695
        %v1109 = vpow.pop %v1108
        %v1110 = vmul.f32 %v1098, 1.442695
        %v1111 = vpow.pop %v1110
        %v1112 = vmul.f32 %v1099, 1.442695
        %v1113 = vpow.pop %v1112
        %v1114 = vmul.f32 %v1100, 1.442695
        %v1115 = vpow.pop %v1114
        %v1116 = vmul.f32 %v1101, 1.442695
        %v1117 = vpow.pop %v1116
        %v1118 = vsel %vm1069, %v1103, 0.0
        %1119 = vadd.xlane.f32.xlu0 %v1118
        %v1120 = vpop.xlane.xlu0 %1119
        %v1121 = vsel %vm1069, %v1105, 0.0
        %1122 = vadd.xlane.f32.xlu0 %v1121
        %v1123 = vpop.xlane.xlu0 %1122
        %v1124 = vsel %vm1069, %v1107, 0.0
        %1125 = vadd.xlane.f32.xlu0 %v1124
        %v1126 = vpop.xlane.xlu0 %1125
        %v1127 = vsel %vm1069, %v1109, 0.0
        %1128 = vadd.xlane.f32.xlu0 %v1127
        %v1129 = vpop.xlane.xlu0 %1128
        %v1130 = vsel %vm1069, %v1111, 0.0
        %1131 = vadd.xlane.f32.xlu0 %v1130
        %v1132 = vpop.xlane.xlu0 %1131
        %v1133 = vsel %vm1069, %v1113, 0.0
        %1134 = vadd.xlane.f32.xlu0 %v1133
        %v1135 = vpop.xlane.xlu0 %1134
        %v1136 = vsel %vm1069, %v1115, 0.0
        %1137 = vadd.xlane.f32.xlu0 %v1136
        %v1138 = vpop.xlane.xlu0 %1137
        %v1139 = vsel %vm1069, %v1117, 0.0
        %1140 = vadd.xlane.f32.xlu0 %v1139
        %v1141 = vpop.xlane.xlu0 %1140
        %v1142 = vrcp.pop %v1120
        %v1143 = vrcp.pop %v1123
        %v1144 = vrcp.pop %v1126
        %v1145 = vrcp.pop %v1129
        %v1146 = vrcp.pop %v1132
        %v1147 = vrcp.pop %v1135
        %v1148 = vrcp.pop %v1138
        %v1149 = vrcp.pop %v1141
        %v1150 = vmul.f32 %v1103, %v1142
        %v1151 = vmul.f32 %v1105, %v1143
        %v1152 = vmul.f32 %v1107, %v1144
        %v1153 = vmul.f32 %v1109, %v1145
        %v1154 = vmul.f32 %v1111, %v1146
        %v1155 = vmul.f32 %v1113, %v1147
        %v1156 = vmul.f32 %v1115, %v1148
        %v1157 = vmul.f32 %v1117, %v1149
        %v1158 = vpack.c.bf16 %v1151, %v1150
        %v1159 = vpack.c.bf16 %v1153, %v1152
        %v1160 = vpack.c.bf16 %v1155, %v1154
        %v1161 = vpack.c.bf16 %v1157, %v1156
        %1163 = vrot.lane.b32.xlu0 %v882, 64
        %v1164 = vpop.permute.xlu0 %1163
        %v1167 = vsel %vm1069, %v1158, 0
        %1169 = vmatprep.subr.bf16.mxu0 0
        %1170 = vmatpush1.bf16.msra.mxu0 %v1164
        %1171 = vmatprep.subr.bf16.mxu0 0
        %1172 = vmatpush1.bf16.msra.mxu0 0
        %1173 = vmatprep.subr.bf16.mxu0 0
        %1174 = vmatpush1.bf16.msra.mxu0 0
        %1175 = vmatprep.subr.bf16.mxu0 0
        %1176 = vmatpush1.bf16.msra.mxu0 0
        %1177 = vmatprep.subr.bf16.mxu0 0
        %1178 = vmatpush1.bf16.msra.mxu0 0
        %1179 = vmatprep.subr.bf16.mxu0 0
        %1180 = vmatpush1.bf16.msra.mxu0 0
        %1181 = vmatprep.subr.bf16.mxu0 0
        %1182 = vmatpush1.bf16.msra.mxu0 0
        %1183 = vmatprep.subr.bf16.mxu0 0
        %1184 = vmatpush1.bf16.msra.mxu0 0
        %1185 = vmatprep.subr.bf16.mxu0 0
        %1186 = vmatpush1.bf16.msra.mxu0 0
        %1187 = vmatprep.subr.bf16.mxu0 0
        %1188 = vmatpush1.bf16.msra.mxu0 0
        %1189 = vmatprep.subr.bf16.mxu0 0
        %1190 = vmatpush1.bf16.msra.mxu0 0
        %1191 = vmatprep.subr.bf16.mxu0 0
        %1192 = vmatpush1.bf16.msra.mxu0 0
        %1193 = vmatprep.subr.bf16.mxu0 0
        %1194 = vmatpush1.bf16.msra.mxu0 0
        %1195 = vmatprep.subr.bf16.mxu0 0
        %1196 = vmatpush1.bf16.msra.mxu0 0
        %1197 = vmatprep.subr.bf16.mxu0 0
        %1198 = vmatpush1.bf16.msra.mxu0 0
        %1199 = vmatprep.subr.bf16.mxu0 0
        %1200 = vmatpush1.bf16.msra.mxu0 0
        %1201 = vmatprep.mubr.bf16.mxu0 0
        %1202 = vmatmul.mubr.bf16.gmra.mrb[0].mxu0 %v1167
        %v1203 = vpop.f32.mrb[0].mxu0
        %v1204 = vadd.f32 0.0, %v1203
        %v1205 = vpop.f32.mrb[0].mxu0
        %v1206 = vpop.f32.mrb[0].mxu0
        %v1207 = vadd.f32 0.0, %v1206
        %v1208 = vpop.f32.mrb[0].mxu0
        %1209 = vdwg.mxu0
        %v1211 = vsel %vm1069, %v1159, 0
        %1213 = vmatprep.subr.bf16.mxu0 0
        %1214 = vmatpush1.bf16.msra.mxu0 %v1164
        %1215 = vmatprep.subr.bf16.mxu0 0
        %1216 = vmatpush1.bf16.msra.mxu0 0
        %1217 = vmatprep.subr.bf16.mxu0 0
        %1218 = vmatpush1.bf16.msra.mxu0 0
        %1219 = vmatprep.subr.bf16.mxu0 0
        %1220 = vmatpush1.bf16.msra.mxu0 0
        %1221 = vmatprep.subr.bf16.mxu0 0
        %1222 = vmatpush1.bf16.msra.mxu0 0
        %1223 = vmatprep.subr.bf16.mxu0 0
        %1224 = vmatpush1.bf16.msra.mxu0 0
        %1225 = vmatprep.subr.bf16.mxu0 0
        %1226 = vmatpush1.bf16.msra.mxu0 0
        %1227 = vmatprep.subr.bf16.mxu0 0
        %1228 = vmatpush1.bf16.msra.mxu0 0
        %1229 = vmatprep.subr.bf16.mxu0 0
        %1230 = vmatpush1.bf16.msra.mxu0 0
        %1231 = vmatprep.subr.bf16.mxu0 0
        %1232 = vmatpush1.bf16.msra.mxu0 0
        %1233 = vmatprep.subr.bf16.mxu0 0
        %1234 = vmatpush1.bf16.msra.mxu0 0
        %1235 = vmatprep.subr.bf16.mxu0 0
        %1236 = vmatpush1.bf16.msra.mxu0 0
        %1237 = vmatprep.subr.bf16.mxu0 0
        %1238 = vmatpush1.bf16.msra.mxu0 0
        %1239 = vmatprep.subr.bf16.mxu0 0
        %1240 = vmatpush1.bf16.msra.mxu0 0
        %1241 = vmatprep.subr.bf16.mxu0 0
        %1242 = vmatpush1.bf16.msra.mxu0 0
        %1243 = vmatprep.subr.bf16.mxu0 0
        %1244 = vmatpush1.bf16.msra.mxu0 0
        %1245 = vmatprep.mubr.bf16.mxu0 0
        %1246 = vmatmul.mubr.bf16.gmra.mrb[0].mxu0 %v1211
        %v1247 = vpop.f32.mrb[0].mxu0
        %v1248 = vadd.f32 0.0, %v1247
        %v1249 = vpop.f32.mrb[0].mxu0
        %v1250 = vpop.f32.mrb[0].mxu0
        %v1251 = vadd.f32 0.0, %v1250
        %v1252 = vpop.f32.mrb[0].mxu0
        %1253 = vdwg.mxu0
        %1255 = vrot.lane.b32.xlu0 %v883, 64
        %v1256 = vpop.permute.xlu0 %1255
        %v1259 = vsel %vm1069, %v1160, 0
        %1261 = vmatprep.subr.bf16.mxu0 0
        %1262 = vmatpush1.bf16.msra.mxu0 %v1256
        %1263 = vmatprep.subr.bf16.mxu0 0
        %1264 = vmatpush1.bf16.msra.mxu0 0
        %1265 = vmatprep.subr.bf16.mxu0 0
        %1266 = vmatpush1.bf16.msra.mxu0 0
        %1267 = vmatprep.subr.bf16.mxu0 0
        %1268 = vmatpush1.bf16.msra.mxu0 0
        %1269 = vmatprep.subr.bf16.mxu0 0
        %1270 = vmatpush1.bf16.msra.mxu0 0
        %1271 = vmatprep.subr.bf16.mxu0 0
        %1272 = vmatpush1.bf16.msra.mxu0 0
        %1273 = vmatprep.subr.bf16.mxu0 0
        %1274 = vmatpush1.bf16.msra.mxu0 0
        %1275 = vmatprep.subr.bf16.mxu0 0
        %1276 = vmatpush1.bf16.msra.mxu0 0
        %1277 = vmatprep.subr.bf16.mxu0 0
        %1278 = vmatpush1.bf16.msra.mxu0 0
        %1279 = vmatprep.subr.bf16.mxu0 0
        %1280 = vmatpush1.bf16.msra.mxu0 0
        %1281 = vmatprep.subr.bf16.mxu0 0
        %1282 = vmatpush1.bf16.msra.mxu0 0
        %1283 = vmatprep.subr.bf16.mxu0 0
        %1284 = vmatpush1.bf16.msra.mxu0 0
        %1285 = vmatprep.subr.bf16.mxu0 0
        %1286 = vmatpush1.bf16.msra.mxu0 0
        %1287 = vmatprep.subr.bf16.mxu0 0
        %1288 = vmatpush1.bf16.msra.mxu0 0
        %1289 = vmatprep.subr.bf16.mxu0 0
        %1290 = vmatpush1.bf16.msra.mxu0 0
        %1291 = vmatprep.subr.bf16.mxu0 0
        %1292 = vmatpush1.bf16.msra.mxu0 0
        %1293 = vmatprep.mubr.bf16.mxu0 0
        %1294 = vmatmul.mubr.bf16.gmra.mrb[0].mxu0 %v1259
        %v1295 = vpop.f32.mrb[0].mxu0
        %v1296 = vadd.f32 0.0, %v1295
        %v1297 = vpop.f32.mrb[0].mxu0
        %v1298 = vpop.f32.mrb[0].mxu0
        %v1299 = vadd.f32 0.0, %v1298
        %v1300 = vpop.f32.mrb[0].mxu0
        %1301 = vdwg.mxu0
        %v1303 = vsel %vm1069, %v1161, 0
        %1305 = vmatprep.subr.bf16.mxu0 0
        %1306 = vmatpush1.bf16.msra.mxu0 %v1256
        %1307 = vmatprep.subr.bf16.mxu0 0
        %1308 = vmatpush1.bf16.msra.mxu0 0
        %1309 = vmatprep.subr.bf16.mxu0 0
        %1310 = vmatpush1.bf16.msra.mxu0 0
        %1311 = vmatprep.subr.bf16.mxu0 0
        %1312 = vmatpush1.bf16.msra.mxu0 0
        %1313 = vmatprep.subr.bf16.mxu0 0
        %1314 = vmatpush1.bf16.msra.mxu0 0
        %1315 = vmatprep.subr.bf16.mxu0 0
        %1316 = vmatpush1.bf16.msra.mxu0 0
        %1317 = vmatprep.subr.bf16.mxu0 0
        %1318 = vmatpush1.bf16.msra.mxu0 0
        %1319 = vmatprep.subr.bf16.mxu0 0
        %1320 = vmatpush1.bf16.msra.mxu0 0
        %1321 = vmatprep.subr.bf16.mxu0 0
        %1322 = vmatpush1.bf16.msra.mxu0 0
        %1323 = vmatprep.subr.bf16.mxu0 0
        %1324 = vmatpush1.bf16.msra.mxu0 0
        %1325 = vmatprep.subr.bf16.mxu0 0
        %1326 = vmatpush1.bf16.msra.mxu0 0
        %1327 = vmatprep.subr.bf16.mxu0 0
        %1328 = vmatpush1.bf16.msra.mxu0 0
        %1329 = vmatprep.subr.bf16.mxu0 0
        %1330 = vmatpush1.bf16.msra.mxu0 0
        %1331 = vmatprep.subr.bf16.mxu0 0
        %1332 = vmatpush1.bf16.msra.mxu0 0
        %1333 = vmatprep.subr.bf16.mxu0 0
        %1334 = vmatpush1.bf16.msra.mxu0 0
        %1335 = vmatprep.subr.bf16.mxu0 0
        %1336 = vmatpush1.bf16.msra.mxu0 0
        %1337 = vmatprep.mubr.bf16.mxu0 0
        %1338 = vmatmul.mubr.bf16.gmra.mrb[0].mxu0 %v1303
        %v1339 = vpop.f32.mrb[0].mxu0
        %v1340 = vadd.f32 0.0, %v1339
        %v1341 = vpop.f32.mrb[0].mxu0
        %v1342 = vpop.f32.mrb[0].mxu0
        %v1343 = vadd.f32 0.0, %v1342
        %v1344 = vpop.f32.mrb[0].mxu0
        %1345 = vdwg.mxu0
        %1348 = vrot.lane.b32.xlu0 %v1248, 32
        %v1349 = vpop.permute.xlu0 %1348
        %1350 = vrot.lane.b32.xlu0 %v1251, 32
        %v1351 = vpop.permute.xlu0 %1350
        %1356 = vrot.lane.b32.xlu0 %v1296, 64
        %v1357 = vpop.permute.xlu0 %1356
        %1358 = vrot.lane.b32.xlu0 %v1299, 64
        %v1359 = vpop.permute.xlu0 %1358
        %1364 = vrot.lane.b32.xlu0 %v1340, 96
        %v1365 = vpop.permute.xlu0 %1364
        %1366 = vrot.lane.b32.xlu0 %v1343, 96
        %v1367 = vpop.permute.xlu0 %1366
        %v1370 = vsel %vm886, %v1204, %v1349
        %v1371 = vsel %vm886, %v1207, %v1351
        %vm1372 = vcmask 523264
        %v1373 = vsel %vm1372, %v1370, %v1357
        %v1374 = vsel %vm1372, %v1371, %v1359
        %vm1375 = vcmask 785408
        %v1376 = vsel %vm1375, %v1373, %v1365
        %v1377 = vsel %vm1375, %v1374, %v1367
        %v1378 = vpack.c.bf16 %v1377, %v1376
        %v1379 = vld [vmem:[%s509] sm:$0xf]
        %v1380 = vld [vmem:[%s509 + $0x4] sm:$0xf]
        %v1381 = vld [vmem:[%s509 + $0x8] sm:$0xf]
        %v1382 = vld [vmem:[%s509 + $0xc] sm:$0xf]
        %v1383 = vld [vmem:[%s509 + $0x10] sm:$0xf]
        %v1384 = vld [vmem:[%s509 + $0x14] sm:$0xf]
        %v1385 = vld [vmem:[%s509 + $0x18] sm:$0xf]
        %v1386 = vld [vmem:[%s509 + $0x1c] sm:$0xf]
        %v1387 = vld [vmem:[%s509 + $0x20] sm:$0xf]
        %v1388 = vld [vmem:[%s509 + $0x24] sm:$0xf]
        %v1389 = vld [vmem:[%s509 + $0x28] sm:$0xf]
        %v1390 = vld [vmem:[%s509 + $0x2c] sm:$0xf]
        %v1391 = vld [vmem:[%s509 + $0x30] sm:$0xf]
        %v1392 = vld [vmem:[%s509 + $0x34] sm:$0xf]
        %v1393 = vld [vmem:[%s509 + $0x38] sm:$0xf]
        %v1394 = vld [vmem:[%s509 + $0x3c] sm:$0xf]
        %v1411 = vunpack.c.l.b16 %v1379
        %v1412 = vunpack.c.l.b16 %v1380
        %v1413 = vunpack.c.l.b16 %v1381
        %v1414 = vunpack.c.l.b16 %v1382
        %v1415 = vunpack.c.l.b16 %v1383
        %v1416 = vunpack.c.l.b16 %v1384
        %v1417 = vunpack.c.l.b16 %v1385
        %v1418 = vunpack.c.l.b16 %v1386
        %v1419 = vunpack.c.l.b16 %v1387
        %v1420 = vunpack.c.l.b16 %v1388
        %v1421 = vunpack.c.l.b16 %v1389
        %v1422 = vunpack.c.l.b16 %v1390
        %v1423 = vunpack.c.l.b16 %v1391
        %v1424 = vunpack.c.l.b16 %v1392
        %v1425 = vunpack.c.l.b16 %v1393
        %v1426 = vunpack.c.l.b16 %v1394
        %v1427 = vpack.c.b16 %v1412, %v1411
        %v1428 = vpack.c.b16 %v1414, %v1413
        %v1429 = vpack.c.b16 %v1416, %v1415
        %v1430 = vpack.c.b16 %v1418, %v1417
        %v1431 = vpack.c.b16 %v1420, %v1419
        %v1432 = vpack.c.b16 %v1422, %v1421
        %v1433 = vpack.c.b16 %v1424, %v1423
        %v1434 = vpack.c.b16 %v1426, %v1425
        %1443 = vmatprep.subr.bf16.mxu0 0
        %1444 = vmatpush1.bf16.msra.mxu0 %v1427
        %1445 = vmatprep.subr.bf16.mxu0 0
        %1446 = vmatpush1.bf16.msra.mxu0 %v1428
        %1447 = vmatprep.subr.bf16.mxu0 0
        %1448 = vmatpush1.bf16.msra.mxu0 %v1429
        %1449 = vmatprep.subr.bf16.mxu0 0
        %1450 = vmatpush1.bf16.msra.mxu0 %v1430
        %1451 = vmatprep.subr.bf16.mxu0 0
        %1452 = vmatpush1.bf16.msra.mxu0 %v1431
        %1453 = vmatprep.subr.bf16.mxu0 0
        %1454 = vmatpush1.bf16.msra.mxu0 %v1432
        %1455 = vmatprep.subr.bf16.mxu0 0
        %1456 = vmatpush1.bf16.msra.mxu0 %v1433
        %1457 = vmatprep.subr.bf16.mxu0 0
        %1458 = vmatpush1.bf16.msra.mxu0 %v1434
        %1459 = vmatprep.subr.bf16.mxu0 0
        %1460 = vmatpush1.bf16.msra.mxu0 0
        %1461 = vmatprep.subr.bf16.mxu0 0
        %1462 = vmatpush1.bf16.msra.mxu0 0
        %1463 = vmatprep.subr.bf16.mxu0 0
        %1464 = vmatpush1.bf16.msra.mxu0 0
        %1465 = vmatprep.subr.bf16.mxu0 0
        %1466 = vmatpush1.bf16.msra.mxu0 0
        %1467 = vmatprep.subr.bf16.mxu0 0
        %1468 = vmatpush1.bf16.msra.mxu0 0
        %1469 = vmatprep.subr.bf16.mxu0 0
        %1470 = vmatpush1.bf16.msra.mxu0 0
        %1471 = vmatprep.subr.bf16.mxu0 0
        %1472 = vmatpush1.bf16.msra.mxu0 0
        %1473 = vmatprep.subr.bf16.mxu0 0
        %1474 = vmatpush1.bf16.msra.mxu0 0
        %1475 = vmatprep.mubr.bf16.mxu0 0
        %1476 = vmatmul.mubr.bf16.gmra.mrb[0].mxu0 %v1378
        %v1477 = vpop.f32.mrb[0].mxu0
        %v1478 = vadd.f32 0.0, %v1477
        %v1479 = vpop.f32.mrb[0].mxu0
        %v1480 = vpop.f32.mrb[0].mxu0
        %v1481 = vadd.f32 0.0, %v1480
        %v1482 = vpop.f32.mrb[0].mxu0
        %1483 = vdwg.mxu0
        %v1484 = vadd.f32 %v597, %v1478
        %v1485 = vadd.f32 %v598, %v1481
        %v1486 = vmul.f32 %v1484, %v1484
        %v1487 = vmul.f32 %v1485, %v1485
        %1488 = vadd.xlane.f32.xlu0 %v1486
        %v1489 = vpop.xlane.xlu0 %1488
        %1490 = vadd.xlane.f32.xlu0 %v1487
        %v1491 = vpop.xlane.xlu0 %1490
        %v1492 = vmul.f32 %v1489, %v605
        %v1493 = vmul.f32 %v1491, %v605
        %v1494 = vadd.f32 %v1492, 1e-05
        %v1495 = vadd.f32 %v1493, 1e-05
        %v1496 = vrsqrt.pop %v1494
        %v1497 = vrsqrt.pop %v1495
        %v1498 = vmul.f32 %v1484, %v1496
        %v1499 = vmul.f32 %v1485, %v1497
        %v1500 = vld [vmem:[%s587] sm:$0x1]
        %v1502 = vlaneseq
        %v1503 = vshrl.u32 %v1502, 7
        %v1504 = vsub.s32 0, %v1503
        %v1505 = vrot.slane %v1500, %v1504
        %v1507 = vmul.f32 %v1498, %v1505
        %v1508 = vmul.f32 %v1499, %v1505
        %v1509 = vpack.c.bf16 %v1508, %v1507
        %v1510 = vld [vmem:[%s518] sm:$0xff]
        %v1511 = vld [vmem:[%s518 + $0x8] sm:$0xff]
        %v1512 = vld [vmem:[%s518 + $0x10] sm:$0xff]
        %v1513 = vld [vmem:[%s518 + $0x18] sm:$0xff]
        %v1514 = vld [vmem:[%s518 + $0x20] sm:$0xff]
        %v1515 = vld [vmem:[%s518 + $0x28] sm:$0xff]
        %v1516 = vld [vmem:[%s518 + $0x30] sm:$0xff]
        %v1517 = vld [vmem:[%s518 + $0x38] sm:$0xff]
        %v1518 = vld [vmem:[%s518 + $0x40] sm:$0xff]
        %v1519 = vld [vmem:[%s518 + $0x48] sm:$0xff]
        %v1520 = vld [vmem:[%s518 + $0x50] sm:$0xff]
        %v1521 = vld [vmem:[%s518 + $0x58] sm:$0xff]
        %v1522 = vld [vmem:[%s518 + $0x60] sm:$0xff]
        %v1523 = vld [vmem:[%s518 + $0x68] sm:$0xff]
        %v1524 = vld [vmem:[%s518 + $0x70] sm:$0xff]
        %v1525 = vld [vmem:[%s518 + $0x78] sm:$0xff]
        %v1526 = vld [vmem:[%s518 + $0x80] sm:$0xff]
        %v1527 = vld [vmem:[%s518 + $0x88] sm:$0xff]
        %v1528 = vld [vmem:[%s518 + $0x90] sm:$0xff]
        %v1529 = vld [vmem:[%s518 + $0x98] sm:$0xff]
        %v1530 = vld [vmem:[%s518 + $0xa0] sm:$0xff]
        %v1531 = vld [vmem:[%s518 + $0xa8] sm:$0xff]
        %v1532 = vld [vmem:[%s518 + $0xb0] sm:$0xff]
        %v1533 = vld [vmem:[%s518 + $0xb8] sm:$0xff]
        %v1534 = vld [vmem:[%s518 + $0xc0] sm:$0xff]
        %v1535 = vld [vmem:[%s518 + $0xc8] sm:$0xff]
        %v1536 = vld [vmem:[%s518 + $0xd0] sm:$0xff]
        %v1537 = vld [vmem:[%s518 + $0xd8] sm:$0xff]
        %v1538 = vld [vmem:[%s518 + $0xe0] sm:$0xff]
        %v1539 = vld [vmem:[%s518 + $0xe8] sm:$0xff]
        %v1540 = vld [vmem:[%s518 + $0xf0] sm:$0xff]
        %v1541 = vld [vmem:[%s518 + $0xf8] sm:$0xff]
        %v1542 = vld [vmem:[%s518 + $0x100] sm:$0xff]
        %v1543 = vld [vmem:[%s518 + $0x108] sm:$0xff]
        %v1544 = vld [vmem:[%s518 + $0x110] sm:$0xff]
        %v1545 = vld [vmem:[%s518 + $0x118] sm:$0xff]
        %v1546 = vld [vmem:[%s518 + $0x120] sm:$0xff]
        %v1547 = vld [vmem:[%s518 + $0x128] sm:$0xff]
        %v1548 = vld [vmem:[%s518 + $0x130] sm:$0xff]
        %v1549 = vld [vmem:[%s518 + $0x138] sm:$0xff]
        %v1550 = vld [vmem:[%s518 + $0x140] sm:$0xff]
        %v1551 = vld [vmem:[%s518 + $0x148] sm:$0xff]
        %v1552 = vld [vmem:[%s518 + $0x150] sm:$0xff]
        %v1553 = vld [vmem:[%s518 + $0x158] sm:$0xff]
        %v1554 = vld [vmem:[%s518 + $0x160] sm:$0xff]
        %v1555 = vld [vmem:[%s518 + $0x168] sm:$0xff]
        %v1556 = vld [vmem:[%s518 + $0x170] sm:$0xff]
        %v1557 = vld [vmem:[%s518 + $0x178] sm:$0xff]
        %v1558 = vld [vmem:[%s518 + $0x180] sm:$0xff]
        %v1559 = vld [vmem:[%s518 + $0x188] sm:$0xff]
        %v1560 = vld [vmem:[%s518 + $0x190] sm:$0xff]
        %v1561 = vld [vmem:[%s518 + $0x198] sm:$0xff]
        %v1562 = vld [vmem:[%s518 + $0x1a0] sm:$0xff]
        %v1563 = vld [vmem:[%s518 + $0x1a8] sm:$0xff]
        %v1564 = vld [vmem:[%s518 + $0x1b0] sm:$0xff]
        %v1565 = vld [vmem:[%s518 + $0x1b8] sm:$0xff]
        %v1566 = vld [vmem:[%s518 + $0x1c0] sm:$0xff]
        %v1567 = vld [vmem:[%s518 + $0x1c8] sm:$0xff]
        %v1568 = vld [vmem:[%s518 + $0x1d0] sm:$0xff]
        %v1569 = vld [vmem:[%s518 + $0x1d8] sm:$0xff]
        %v1570 = vld [vmem:[%s518 + $0x1e0] sm:$0xff]
        %v1571 = vld [vmem:[%s518 + $0x1e8] sm:$0xff]
        %v1572 = vld [vmem:[%s518 + $0x1f0] sm:$0xff]
        %v1573 = vld [vmem:[%s518 + $0x1f8] sm:$0xff]
        %v1638 = vunpack.c.l.b16 %v1510
        %v1639 = vunpack.c.h.b16 %v1510
        %v1640 = vunpack.c.l.b16 %v1511
        %v1641 = vunpack.c.h.b16 %v1511
        %v1642 = vunpack.c.l.b16 %v1512
        %v1643 = vunpack.c.h.b16 %v1512
        %v1644 = vunpack.c.l.b16 %v1513
        %v1645 = vunpack.c.h.b16 %v1513
        %v1646 = vunpack.c.l.b16 %v1514
        %v1647 = vunpack.c.h.b16 %v1514
        %v1648 = vunpack.c.l.b16 %v1515
        %v1649 = vunpack.c.h.b16 %v1515
        %v1650 = vunpack.c.l.b16 %v1516
        %v1651 = vunpack.c.h.b16 %v1516
        %v1652 = vunpack.c.l.b16 %v1517
        %v1653 = vunpack.c.h.b16 %v1517
        %v1654 = vunpack.c.l.b16 %v1518
        %v1655 = vunpack.c.h.b16 %v1518
        %v1656 = vunpack.c.l.b16 %v1519
        %v1657 = vunpack.c.h.b16 %v1519
        %v1658 = vunpack.c.l.b16 %v1520
        %v1659 = vunpack.c.h.b16 %v1520
        %v1660 = vunpack.c.l.b16 %v1521
        %v1661 = vunpack.c.h.b16 %v1521
        %v1662 = vunpack.c.l.b16 %v1522
        %v1663 = vunpack.c.h.b16 %v1522
        %v1664 = vunpack.c.l.b16 %v1523
        %v1665 = vunpack.c.h.b16 %v1523
        %v1666 = vunpack.c.l.b16 %v1524
        %v1667 = vunpack.c.h.b16 %v1524
        %v1668 = vunpack.c.l.b16 %v1525
        %v1669 = vunpack.c.h.b16 %v1525
        %v1670 = vunpack.c.l.b16 %v1526
        %v1671 = vunpack.c.h.b16 %v1526
        %v1672 = vunpack.c.l.b16 %v1527
        %v1673 = vunpack.c.h.b16 %v1527
        %v1674 = vunpack.c.l.b16 %v1528
        %v1675 = vunpack.c.h.b16 %v1528
        %v1676 = vunpack.c.l.b16 %v1529
        %v1677 = vunpack.c.h.b16 %v1529
        %v1678 = vunpack.c.l.b16 %v1530
        %v1679 = vunpack.c.h.b16 %v1530
        %v1680 = vunpack.c.l.b16 %v1531
        %v1681 = vunpack.c.h.b16 %v1531
        %v1682 = vunpack.c.l.b16 %v1532
        %v1683 = vunpack.c.h.b16 %v1532
        %v1684 = vunpack.c.l.b16 %v1533
        %v1685 = vunpack.c.h.b16 %v1533
        %v1686 = vunpack.c.l.b16 %v1534
        %v1687 = vunpack.c.h.b16 %v1534
        %v1688 = vunpack.c.l.b16 %v1535
        %v1689 = vunpack.c.h.b16 %v1535
        %v1690 = vunpack.c.l.b16 %v1536
        %v1691 = vunpack.c.h.b16 %v1536
        %v1692 = vunpack.c.l.b16 %v1537
        %v1693 = vunpack.c.h.b16 %v1537
        %v1694 = vunpack.c.l.b16 %v1538
        %v1695 = vunpack.c.h.b16 %v1538
        %v1696 = vunpack.c.l.b16 %v1539
        %v1697 = vunpack.c.h.b16 %v1539
        %v1698 = vunpack.c.l.b16 %v1540
        %v1699 = vunpack.c.h.b16 %v1540
        %v1700 = vunpack.c.l.b16 %v1541
        %v1701 = vunpack.c.h.b16 %v1541
        %v1702 = vunpack.c.l.b16 %v1542
        %v1703 = vunpack.c.h.b16 %v1542
        %v1704 = vunpack.c.l.b16 %v1543
        %v1705 = vunpack.c.h.b16 %v1543
        %v1706 = vunpack.c.l.b16 %v1544
        %v1707 = vunpack.c.h.b16 %v1544
        %v1708 = vunpack.c.l.b16 %v1545
        %v1709 = vunpack.c.h.b16 %v1545
        %v1710 = vunpack.c.l.b16 %v1546
        %v1711 = vunpack.c.h.b16 %v1546
        %v1712 = vunpack.c.l.b16 %v1547
        %v1713 = vunpack.c.h.b16 %v1547
        %v1714 = vunpack.c.l.b16 %v1548
        %v1715 = vunpack.c.h.b16 %v1548
        %v1716 = vunpack.c.l.b16 %v1549
        %v1717 = vunpack.c.h.b16 %v1549
        %v1718 = vunpack.c.l.b16 %v1550
        %v1719 = vunpack.c.h.b16 %v1550
        %v1720 = vunpack.c.l.b16 %v1551
        %v1721 = vunpack.c.h.b16 %v1551
        %v1722 = vunpack.c.l.b16 %v1552
        %v1723 = vunpack.c.h.b16 %v1552
        %v1724 = vunpack.c.l.b16 %v1553
        %v1725 = vunpack.c.h.b16 %v1553
        %v1726 = vunpack.c.l.b16 %v1554
        %v1727 = vunpack.c.h.b16 %v1554
        %v1728 = vunpack.c.l.b16 %v1555
        %v1729 = vunpack.c.h.b16 %v1555
        %v1730 = vunpack.c.l.b16 %v1556
        %v1731 = vunpack.c.h.b16 %v1556
        %v1732 = vunpack.c.l.b16 %v1557
        %v1733 = vunpack.c.h.b16 %v1557
        %v1734 = vunpack.c.l.b16 %v1558
        %v1735 = vunpack.c.h.b16 %v1558
        %v1736 = vunpack.c.l.b16 %v1559
        %v1737 = vunpack.c.h.b16 %v1559
        %v1738 = vunpack.c.l.b16 %v1560
        %v1739 = vunpack.c.h.b16 %v1560
        %v1740 = vunpack.c.l.b16 %v1561
        %v1741 = vunpack.c.h.b16 %v1561
        %v1742 = vunpack.c.l.b16 %v1562
        %v1743 = vunpack.c.h.b16 %v1562
        %v1744 = vunpack.c.l.b16 %v1563
        %v1745 = vunpack.c.h.b16 %v1563
        %v1746 = vunpack.c.l.b16 %v1564
        %v1747 = vunpack.c.h.b16 %v1564
        %v1748 = vunpack.c.l.b16 %v1565
        %v1749 = vunpack.c.h.b16 %v1565
        %v1750 = vunpack.c.l.b16 %v1566
        %v1751 = vunpack.c.h.b16 %v1566
        %v1752 = vunpack.c.l.b16 %v1567
        %v1753 = vunpack.c.h.b16 %v1567
        %v1754 = vunpack.c.l.b16 %v1568
        %v1755 = vunpack.c.h.b16 %v1568
        %v1756 = vunpack.c.l.b16 %v1569
        %v1757 = vunpack.c.h.b16 %v1569
        %v1758 = vunpack.c.l.b16 %v1570
        %v1759 = vunpack.c.h.b16 %v1570
        %v1760 = vunpack.c.l.b16 %v1571
        %v1761 = vunpack.c.h.b16 %v1571
        %v1762 = vunpack.c.l.b16 %v1572
        %v1763 = vunpack.c.h.b16 %v1572
        %v1764 = vunpack.c.l.b16 %v1573
        %v1765 = vunpack.c.h.b16 %v1573
        %v1766 = vpack.c.b16 %v1646, %v1638
        %v1767 = vpack.c.b16 %v1647, %v1639
        %v1768 = vpack.c.b16 %v1648, %v1640
        %v1769 = vpack.c.b16 %v1649, %v1641
        %v1770 = vpack.c.b16 %v1650, %v1642
        %v1771 = vpack.c.b16 %v1651, %v1643
        %v1772 = vpack.c.b16 %v1652, %v1644
        %v1773 = vpack.c.b16 %v1653, %v1645
        %v1774 = vpack.c.b16 %v1662, %v1654
        %v1775 = vpack.c.b16 %v1663, %v1655
        %v1776 = vpack.c.b16 %v1664, %v1656
        %v1777 = vpack.c.b16 %v1665, %v1657
        %v1778 = vpack.c.b16 %v1666, %v1658
        %v1779 = vpack.c.b16 %v1667, %v1659
        %v1780 = vpack.c.b16 %v1668, %v1660
        %v1781 = vpack.c.b16 %v1669, %v1661
        %v1782 = vpack.c.b16 %v1678, %v1670
        %v1783 = vpack.c.b16 %v1679, %v1671
        %v1784 = vpack.c.b16 %v1680, %v1672
        %v1785 = vpack.c.b16 %v1681, %v1673
        %v1786 = vpack.c.b16 %v1682, %v1674
        %v1787 = vpack.c.b16 %v1683, %v1675
        %v1788 = vpack.c.b16 %v1684, %v1676
        %v1789 = vpack.c.b16 %v1685, %v1677
        %v1790 = vpack.c.b16 %v1694, %v1686
        %v1791 = vpack.c.b16 %v1695, %v1687
        %v1792 = vpack.c.b16 %v1696, %v1688
        %v1793 = vpack.c.b16 %v1697, %v1689
        %v1794 = vpack.c.b16 %v1698, %v1690
        %v1795 = vpack.c.b16 %v1699, %v1691
        %v1796 = vpack.c.b16 %v1700, %v1692
        %v1797 = vpack.c.b16 %v1701, %v1693
        %v1798 = vpack.c.b16 %v1710, %v1702
        %v1799 = vpack.c.b16 %v1711, %v1703
        %v1800 = vpack.c.b16 %v1712, %v1704
        %v1801 = vpack.c.b16 %v1713, %v1705
        %v1802 = vpack.c.b16 %v1714, %v1706
        %v1803 = vpack.c.b16 %v1715, %v1707
        %v1804 = vpack.c.b16 %v1716, %v1708
        %v1805 = vpack.c.b16 %v1717, %v1709
        %v1806 = vpack.c.b16 %v1726, %v1718
        %v1807 = vpack.c.b16 %v1727, %v1719
        %v1808 = vpack.c.b16 %v1728, %v1720
        %v1809 = vpack.c.b16 %v1729, %v1721
        %v1810 = vpack.c.b16 %v1730, %v1722
        %v1811 = vpack.c.b16 %v1731, %v1723
        %v1812 = vpack.c.b16 %v1732, %v1724
        %v1813 = vpack.c.b16 %v1733, %v1725
        %v1814 = vpack.c.b16 %v1742, %v1734
        %v1815 = vpack.c.b16 %v1743, %v1735
        %v1816 = vpack.c.b16 %v1744, %v1736
        %v1817 = vpack.c.b16 %v1745, %v1737
        %v1818 = vpack.c.b16 %v1746, %v1738
        %v1819 = vpack.c.b16 %v1747, %v1739
        %v1820 = vpack.c.b16 %v1748, %v1740
        %v1821 = vpack.c.b16 %v1749, %v1741
        %v1822 = vpack.c.b16 %v1758, %v1750
        %v1823 = vpack.c.b16 %v1759, %v1751
        %v1824 = vpack.c.b16 %v1760, %v1752
        %v1825 = vpack.c.b16 %v1761, %v1753
        %v1826 = vpack.c.b16 %v1762, %v1754
        %v1827 = vpack.c.b16 %v1763, %v1755
        %v1828 = vpack.c.b16 %v1764, %v1756
        %v1829 = vpack.c.b16 %v1765, %v1757
        %1894 = vmatprep.subr.bf16.mxu0 %v1767
        %1895 = vmatpush1.bf16.msra.mxu0 %v1766
        %1896 = vmatprep.subr.bf16.mxu0 %v1775
        %1897 = vmatpush1.bf16.msra.mxu0 %v1774
        %1898 = vmatprep.subr.bf16.mxu0 %v1783
        %1899 = vmatpush1.bf16.msra.mxu0 %v1782
        %1900 = vmatprep.subr.bf16.mxu0 %v1791
        %1901 = vmatpush1.bf16.msra.mxu0 %v1790
        %1902 = vmatprep.subr.bf16.mxu0 %v1799
        %1903 = vmatpush1.bf16.msra.mxu0 %v1798
        %1904 = vmatprep.subr.bf16.mxu0 %v1807
        %1905 = vmatpush1.bf16.msra.mxu0 %v1806
        %1906 = vmatprep.subr.bf16.mxu0 %v1815
        %1907 = vmatpush1.bf16.msra.mxu0 %v1814
        %1908 = vmatprep.subr.bf16.mxu0 %v1823
        %1909 = vmatpush1.bf16.msra.mxu0 %v1822
        %1910 = vmatprep.subr.bf16.mxu0 0
        %1911 = vmatpush1.bf16.msra.mxu0 0
        %1912 = vmatprep.subr.bf16.mxu0 0
        %1913 = vmatpush1.bf16.msra.mxu0 0
        %1914 = vmatprep.subr.bf16.mxu0 0
        %1915 = vmatpush1.bf16.msra.mxu0 0
        %1916 = vmatprep.subr.bf16.mxu0 0
        %1917 = vmatpush1.bf16.msra.mxu0 0
        %1918 = vmatprep.subr.bf16.mxu0 0
        %1919 = vmatpush1.bf16.msra.mxu0 0
        %1920 = vmatprep.subr.bf16.mxu0 0
        %1921 = vmatpush1.bf16.msra.mxu0 0
        %1922 = vmatprep.subr.bf16.mxu0 0
        %1923 = vmatpush1.bf16.msra.mxu0 0
        %1924 = vmatprep.subr.bf16.mxu0 0
        %1925 = vmatpush1.bf16.msra.mxu0 0
        %1926 = vmatprep.mubr.bf16.mxu0 0
        %1927 = vmatmul.mubr.bf16.gmra.mrb[0].mxu0 %v1509
        %v1928 = vpop.f32.mrb[0].mxu0
        %v1929 = vadd.f32 0.0, %v1928
        %v1930 = vpop.f32.mrb[0].mxu0
        %v1931 = vadd.f32 0.0, %v1930
        %v1932 = vpop.f32.mrb[0].mxu0
        %v1933 = vadd.f32 0.0, %v1932
        %v1934 = vpop.f32.mrb[0].mxu0
        %v1935 = vadd.f32 0.0, %v1934
        %1936 = vdwg.mxu0
        %1937 = vmatprep.subr.bf16.mxu0 %v1769
        %1938 = vmatpush1.bf16.msra.mxu0 %v1768
        %1939 = vmatprep.subr.bf16.mxu0 %v1777
        %1940 = vmatpush1.bf16.msra.mxu0 %v1776
        %1941 = vmatprep.subr.bf16.mxu0 %v1785
        %1942 = vmatpush1.bf16.msra.mxu0 %v1784
        %1943 = vmatprep.subr.bf16.mxu0 %v1793
        %1944 = vmatpush1.bf16.msra.mxu0 %v1792
        %1945 = vmatprep.subr.bf16.mxu0 %v1801
        %1946 = vmatpush1.bf16.msra.mxu0 %v1800
        %1947 = vmatprep.subr.bf16.mxu0 %v1809
        %1948 = vmatpush1.bf16.msra.mxu0 %v1808
        %1949 = vmatprep.subr.bf16.mxu0 %v1817
        %1950 = vmatpush1.bf16.msra.mxu0 %v1816
        %1951 = vmatprep.subr.bf16.mxu0 %v1825
        %1952 = vmatpush1.bf16.msra.mxu0 %v1824
        %1953 = vmatprep.subr.bf16.mxu0 0
        %1954 = vmatpush1.bf16.msra.mxu0 0
        %1955 = vmatprep.subr.bf16.mxu0 0
        %1956 = vmatpush1.bf16.msra.mxu0 0
        %1957 = vmatprep.subr.bf16.mxu0 0
        %1958 = vmatpush1.bf16.msra.mxu0 0
        %1959 = vmatprep.subr.bf16.mxu0 0
        %1960 = vmatpush1.bf16.msra.mxu0 0
        %1961 = vmatprep.subr.bf16.mxu0 0
        %1962 = vmatpush1.bf16.msra.mxu0 0
        %1963 = vmatprep.subr.bf16.mxu0 0
        %1964 = vmatpush1.bf16.msra.mxu0 0
        %1965 = vmatprep.subr.bf16.mxu0 0
        %1966 = vmatpush1.bf16.msra.mxu0 0
        %1967 = vmatprep.subr.bf16.mxu0 0
        %1968 = vmatpush1.bf16.msra.mxu0 0
        %1969 = vmatprep.mubr.bf16.mxu0 0
        %1970 = vmatmul.mubr.bf16.gmra.mrb[0].mxu0 %v1509
        %v1971 = vpop.f32.mrb[0].mxu0
        %v1972 = vadd.f32 0.0, %v1971
        %v1973 = vpop.f32.mrb[0].mxu0
        %v1974 = vadd.f32 0.0, %v1973
        %v1975 = vpop.f32.mrb[0].mxu0
        %v1976 = vadd.f32 0.0, %v1975
        %v1977 = vpop.f32.mrb[0].mxu0
        %v1978 = vadd.f32 0.0, %v1977
        %1979 = vdwg.mxu0
        %1980 = vmatprep.subr.bf16.mxu0 %v1771
        %1981 = vmatpush1.bf16.msra.mxu0 %v1770
        %1982 = vmatprep.subr.bf16.mxu0 %v1779
        %1983 = vmatpush1.bf16.msra.mxu0 %v1778
        %1984 = vmatprep.subr.bf16.mxu0 %v1787
        %1985 = vmatpush1.bf16.msra.mxu0 %v1786
        %1986 = vmatprep.subr.bf16.mxu0 %v1795
        %1987 = vmatpush1.bf16.msra.mxu0 %v1794
        %1988 = vmatprep.subr.bf16.mxu0 %v1803
        %1989 = vmatpush1.bf16.msra.mxu0 %v1802
        %1990 = vmatprep.subr.bf16.mxu0 %v1811
        %1991 = vmatpush1.bf16.msra.mxu0 %v1810
        %1992 = vmatprep.subr.bf16.mxu0 %v1819
        %1993 = vmatpush1.bf16.msra.mxu0 %v1818
        %1994 = vmatprep.subr.bf16.mxu0 %v1827
        %1995 = vmatpush1.bf16.msra.mxu0 %v1826
        %1996 = vmatprep.subr.bf16.mxu0 0
        %1997 = vmatpush1.bf16.msra.mxu0 0
        %1998 = vmatprep.subr.bf16.mxu0 0
        %1999 = vmatpush1.bf16.msra.mxu0 0
        %2000 = vmatprep.subr.bf16.mxu0 0
        %2001 = vmatpush1.bf16.msra.mxu0 0
        %2002 = vmatprep.subr.bf16.mxu0 0
        %2003 = vmatpush1.bf16.msra.mxu0 0
        %2004 = vmatprep.subr.bf16.mxu0 0
        %2005 = vmatpush1.bf16.msra.mxu0 0
        %2006 = vmatprep.subr.bf16.mxu0 0
        %2007 = vmatpush1.bf16.msra.mxu0 0
        %2008 = vmatprep.subr.bf16.mxu0 0
        %2009 = vmatpush1.bf16.msra.mxu0 0
        %2010 = vmatprep.subr.bf16.mxu0 0
        %2011 = vmatpush1.bf16.msra.mxu0 0
        %2012 = vmatprep.mubr.bf16.mxu0 0
        %2013 = vmatmul.mubr.bf16.gmra.mrb[0].mxu0 %v1509
        %v2014 = vpop.f32.mrb[0].mxu0
        %v2015 = vadd.f32 0.0, %v2014
        %v2016 = vpop.f32.mrb[0].mxu0
        %v2017 = vadd.f32 0.0, %v2016
        %v2018 = vpop.f32.mrb[0].mxu0
        %v2019 = vadd.f32 0.0, %v2018
        %v2020 = vpop.f32.mrb[0].mxu0
        %v2021 = vadd.f32 0.0, %v2020
        %2022 = vdwg.mxu0
        %2023 = vmatprep.subr.bf16.mxu0 %v1773
        %2024 = vmatpush1.bf16.msra.mxu0 %v1772
        %2025 = vmatprep.subr.bf16.mxu0 %v1781
        %2026 = vmatpush1.bf16.msra.mxu0 %v1780
        %2027 = vmatprep.subr.bf16.mxu0 %v1789
        %2028 = vmatpush1.bf16.msra.mxu0 %v1788
        %2029 = vmatprep.subr.bf16.mxu0 %v1797
        %2030 = vmatpush1.bf16.msra.mxu0 %v1796
        %2031 = vmatprep.subr.bf16.mxu0 %v1805
        %2032 = vmatpush1.bf16.msra.mxu0 %v1804
        %2033 = vmatprep.subr.bf16.mxu0 %v1813
        %2034 = vmatpush1.bf16.msra.mxu0 %v1812
        %2035 = vmatprep.subr.bf16.mxu0 %v1821
        %2036 = vmatpush1.bf16.msra.mxu0 %v1820
        %2037 = vmatprep.subr.bf16.mxu0 %v1829
        %2038 = vmatpush1.bf16.msra.mxu0 %v1828
        %2039 = vmatprep.subr.bf16.mxu0 0
        %2040 = vmatpush1.bf16.msra.mxu0 0
        %2041 = vmatprep.subr.bf16.mxu0 0
        %2042 = vmatpush1.bf16.msra.mxu0 0
        %2043 = vmatprep.subr.bf16.mxu0 0
        %2044 = vmatpush1.bf16.msra.mxu0 0
        %2045 = vmatprep.subr.bf16.mxu0 0
        %2046 = vmatpush1.bf16.msra.mxu0 0
        %2047 = vmatprep.subr.bf16.mxu0 0
        %2048 = vmatpush1.bf16.msra.mxu0 0
        %2049 = vmatprep.subr.bf16.mxu0 0
        %2050 = vmatpush1.bf16.msra.mxu0 0
        %2051 = vmatprep.subr.bf16.mxu0 0
        %2052 = vmatpush1.bf16.msra.mxu0 0
        %2053 = vmatprep.subr.bf16.mxu0 0
        %2054 = vmatpush1.bf16.msra.mxu0 0
        %2055 = vmatprep.mubr.bf16.mxu0 0
        %2056 = vmatmul.mubr.bf16.gmra.mrb[0].mxu0 %v1509
        %v2057 = vpop.f32.mrb[0].mxu0
        %v2058 = vadd.f32 0.0, %v2057
        %v2059 = vpop.f32.mrb[0].mxu0
        %v2060 = vadd.f32 0.0, %v2059
        %v2061 = vpop.f32.mrb[0].mxu0
        %v2062 = vadd.f32 0.0, %v2061
        %v2063 = vpop.f32.mrb[0].mxu0
        %v2064 = vadd.f32 0.0, %v2063
        %2065 = vdwg.mxu0
        %v2066 = vxor.u32 %v1929, 2147483648
        %v2067 = vxor.u32 %v1931, 2147483648
        %v2068 = vxor.u32 %v1972, 2147483648
        %v2069 = vxor.u32 %v1974, 2147483648
        %v2070 = vxor.u32 %v1933, 2147483648
        %v2071 = vxor.u32 %v1935, 2147483648
        %v2072 = vxor.u32 %v1976, 2147483648
        %v2073 = vxor.u32 %v1978, 2147483648
        %v2074 = vmul.f32 %v2066, 1.442695
        %v2075 = vpow.pop %v2074
        %v2076 = vmul.f32 %v2067, 1.442695
        %v2077 = vpow.pop %v2076
        %v2078 = vmul.f32 %v2068, 1.442695
        %v2079 = vpow.pop %v2078
        %v2080 = vmul.f32 %v2069, 1.442695
        %v2081 = vpow.pop %v2080
        %v2082 = vmul.f32 %v2070, 1.442695
        %v2083 = vpow.pop %v2082
        %v2084 = vmul.f32 %v2071, 1.442695
        %v2085 = vpow.pop %v2084
        %v2086 = vmul.f32 %v2072, 1.442695
        %v2087 = vpow.pop %v2086
        %v2088 = vmul.f32 %v2073, 1.442695
        %v2089 = vpow.pop %v2088
        %v2090 = vadd.f32 %v2075, 1.0
        %v2091 = vadd.f32 %v2077, 1.0
        %v2092 = vadd.f32 %v2079, 1.0
        %v2093 = vadd.f32 %v2081, 1.0
        %v2094 = vadd.f32 %v2083, 1.0
        %v2095 = vadd.f32 %v2085, 1.0
        %v2096 = vadd.f32 %v2087, 1.0
        %v2097 = vadd.f32 %v2089, 1.0
        %v2098 = vrcp.pop %v2090
        %v2099 = vmul.f32 1.0, %v2098
        %v2100 = vrcp.pop %v2091
        %v2101 = vmul.f32 1.0, %v2100
        %v2102 = vrcp.pop %v2092
        %v2103 = vmul.f32 1.0, %v2102
        %v2104 = vrcp.pop %v2093
        %v2105 = vmul.f32 1.0, %v2104
        %v2106 = vrcp.pop %v2094
        %v2107 = vmul.f32 1.0, %v2106
        %v2108 = vrcp.pop %v2095
        %v2109 = vmul.f32 1.0, %v2108
        %v2110 = vrcp.pop %v2096
        %v2111 = vmul.f32 1.0, %v2110
        %v2112 = vrcp.pop %v2097
        %v2113 = vmul.f32 1.0, %v2112
        %v2114 = vmul.f32 %v1929, %v2099
        %v2115 = vmul.f32 %v1931, %v2101
        %v2116 = vmul.f32 %v1972, %v2103
        %v2117 = vmul.f32 %v1974, %v2105
        %v2118 = vmul.f32 %v1933, %v2107
        %v2119 = vmul.f32 %v1935, %v2109
        %v2120 = vmul.f32 %v1976, %v2111
        %v2121 = vmul.f32 %v1978, %v2113
        %v2122 = vmul.f32 %v2114, %v2015
        %v2123 = vmul.f32 %v2115, %v2017
        %v2124 = vmul.f32 %v2116, %v2058
        %v2125 = vmul.f32 %v2117, %v2060
        %v2126 = vmul.f32 %v2118, %v2019
        %v2127 = vmul.f32 %v2119, %v2021
        %v2128 = vmul.f32 %v2120, %v2062
        %v2129 = vmul.f32 %v2121, %v2064
        %v2130 = vpack.c.bf16 %v2126, %v2122
        %v2131 = vpack.c.bf16 %v2127, %v2123
        %v2132 = vpack.c.bf16 %v2128, %v2124
        %v2133 = vpack.c.bf16 %v2129, %v2125
        %v2134 = vld [vmem:[%s527] sm:$0xf]
        %v2135 = vld [vmem:[%s527 + $0x4] sm:$0xf]
        %v2136 = vld [vmem:[%s527 + $0x8] sm:$0xf]
        %v2137 = vld [vmem:[%s527 + $0xc] sm:$0xf]
        %v2138 = vld [vmem:[%s527 + $0x10] sm:$0xf]
        %v2139 = vld [vmem:[%s527 + $0x14] sm:$0xf]
        %v2140 = vld [vmem:[%s527 + $0x18] sm:$0xf]
        %v2141 = vld [vmem:[%s527 + $0x1c] sm:$0xf]
        %v2142 = vld [vmem:[%s527 + $0x20] sm:$0xf]
        %v2143 = vld [vmem:[%s527 + $0x24] sm:$0xf]
        %v2144 = vld [vmem:[%s527 + $0x28] sm:$0xf]
        %v2145 = vld [vmem:[%s527 + $0x2c] sm:$0xf]
        %v2146 = vld [vmem:[%s527 + $0x30] sm:$0xf]
        %v2147 = vld [vmem:[%s527 + $0x34] sm:$0xf]
        %v2148 = vld [vmem:[%s527 + $0x38] sm:$0xf]
        %v2149 = vld [vmem:[%s527 + $0x3c] sm:$0xf]
        %v2150 = vld [vmem:[%s527 + $0x40] sm:$0xf]
        %v2151 = vld [vmem:[%s527 + $0x44] sm:$0xf]
        %v2152 = vld [vmem:[%s527 + $0x48] sm:$0xf]
        %v2153 = vld [vmem:[%s527 + $0x4c] sm:$0xf]
        %v2154 = vld [vmem:[%s527 + $0x50] sm:$0xf]
        %v2155 = vld [vmem:[%s527 + $0x54] sm:$0xf]
        %v2156 = vld [vmem:[%s527 + $0x58] sm:$0xf]
        %v2157 = vld [vmem:[%s527 + $0x5c] sm:$0xf]
        %v2158 = vld [vmem:[%s527 + $0x60] sm:$0xf]
        %v2159 = vld [vmem:[%s527 + $0x64] sm:$0xf]
        %v2160 = vld [vmem:[%s527 + $0x68] sm:$0xf]
        %v2161 = vld [vmem:[%s527 + $0x6c] sm:$0xf]
        %v2162 = vld [vmem:[%s527 + $0x70] sm:$0xf]
        %v2163 = vld [vmem:[%s527 + $0x74] sm:$0xf]
        %v2164 = vld [vmem:[%s527 + $0x78] sm:$0xf]
        %v2165 = vld [vmem:[%s527 + $0x7c] sm:$0xf]
        %v2166 = vld [vmem:[%s527 + $0x80] sm:$0xf]
        %v2167 = vld [vmem:[%s527 + $0x84] sm:$0xf]
        %v2168 = vld [vmem:[%s527 + $0x88] sm:$0xf]
        %v2169 = vld [vmem:[%s527 + $0x8c] sm:$0xf]
        %v2170 = vld [vmem:[%s527 + $0x90] sm:$0xf]
        %v2171 = vld [vmem:[%s527 + $0x94] sm:$0xf]
        %v2172 = vld [vmem:[%s527 + $0x98] sm:$0xf]
        %v2173 = vld [vmem:[%s527 + $0x9c] sm:$0xf]
        %v2174 = vld [vmem:[%s527 + $0xa0] sm:$0xf]
        %v2175 = vld [vmem:[%s527 + $0xa4] sm:$0xf]
        %v2176 = vld [vmem:[%s527 + $0xa8] sm:$0xf]
        %v2177 = vld [vmem:[%s527 + $0xac] sm:$0xf]
        %v2178 = vld [vmem:[%s527 + $0xb0] sm:$0xf]
        %v2179 = vld [vmem:[%s527 + $0xb4] sm:$0xf]
        %v2180 = vld [vmem:[%s527 + $0xb8] sm:$0xf]
        %v2181 = vld [vmem:[%s527 + $0xbc] sm:$0xf]
        %v2182 = vld [vmem:[%s527 + $0xc0] sm:$0xf]
        %v2183 = vld [vmem:[%s527 + $0xc4] sm:$0xf]
        %v2184 = vld [vmem:[%s527 + $0xc8] sm:$0xf]
        %v2185 = vld [vmem:[%s527 + $0xcc] sm:$0xf]
        %v2186 = vld [vmem:[%s527 + $0xd0] sm:$0xf]
        %v2187 = vld [vmem:[%s527 + $0xd4] sm:$0xf]
        %v2188 = vld [vmem:[%s527 + $0xd8] sm:$0xf]
        %v2189 = vld [vmem:[%s527 + $0xdc] sm:$0xf]
        %v2190 = vld [vmem:[%s527 + $0xe0] sm:$0xf]
        %v2191 = vld [vmem:[%s527 + $0xe4] sm:$0xf]
        %v2192 = vld [vmem:[%s527 + $0xe8] sm:$0xf]
        %v2193 = vld [vmem:[%s527 + $0xec] sm:$0xf]
        %v2194 = vld [vmem:[%s527 + $0xf0] sm:$0xf]
        %v2195 = vld [vmem:[%s527 + $0xf4] sm:$0xf]
        %v2196 = vld [vmem:[%s527 + $0xf8] sm:$0xf]
        %v2197 = vld [vmem:[%s527 + $0xfc] sm:$0xf]
        %v2262 = vunpack.c.l.b16 %v2134
        %v2263 = vunpack.c.l.b16 %v2135
        %v2264 = vunpack.c.l.b16 %v2136
        %v2265 = vunpack.c.l.b16 %v2137
        %v2266 = vunpack.c.l.b16 %v2138
        %v2267 = vunpack.c.l.b16 %v2139
        %v2268 = vunpack.c.l.b16 %v2140
        %v2269 = vunpack.c.l.b16 %v2141
        %v2270 = vunpack.c.l.b16 %v2142
        %v2271 = vunpack.c.l.b16 %v2143
        %v2272 = vunpack.c.l.b16 %v2144
        %v2273 = vunpack.c.l.b16 %v2145
        %v2274 = vunpack.c.l.b16 %v2146
        %v2275 = vunpack.c.l.b16 %v2147
        %v2276 = vunpack.c.l.b16 %v2148
        %v2277 = vunpack.c.l.b16 %v2149
        %v2278 = vunpack.c.l.b16 %v2150
        %v2279 = vunpack.c.l.b16 %v2151
        %v2280 = vunpack.c.l.b16 %v2152
        %v2281 = vunpack.c.l.b16 %v2153
        %v2282 = vunpack.c.l.b16 %v2154
        %v2283 = vunpack.c.l.b16 %v2155
        %v2284 = vunpack.c.l.b16 %v2156
        %v2285 = vunpack.c.l.b16 %v2157
        %v2286 = vunpack.c.l.b16 %v2158
        %v2287 = vunpack.c.l.b16 %v2159
        %v2288 = vunpack.c.l.b16 %v2160
        %v2289 = vunpack.c.l.b16 %v2161
        %v2290 = vunpack.c.l.b16 %v2162
        %v2291 = vunpack.c.l.b16 %v2163
        %v2292 = vunpack.c.l.b16 %v2164
        %v2293 = vunpack.c.l.b16 %v2165
        %v2294 = vunpack.c.l.b16 %v2166
        %v2295 = vunpack.c.l.b16 %v2167
        %v2296 = vunpack.c.l.b16 %v2168
        %v2297 = vunpack.c.l.b16 %v2169
        %v2298 = vunpack.c.l.b16 %v2170
        %v2299 = vunpack.c.l.b16 %v2171
        %v2300 = vunpack.c.l.b16 %v2172
        %v2301 = vunpack.c.l.b16 %v2173
        %v2302 = vunpack.c.l.b16 %v2174
        %v2303 = vunpack.c.l.b16 %v2175
        %v2304 = vunpack.c.l.b16 %v2176
        %v2305 = vunpack.c.l.b16 %v2177
        %v2306 = vunpack.c.l.b16 %v2178
        %v2307 = vunpack.c.l.b16 %v2179
        %v2308 = vunpack.c.l.b16 %v2180
        %v2309 = vunpack.c.l.b16 %v2181
        %v2310 = vunpack.c.l.b16 %v2182
        %v2311 = vunpack.c.l.b16 %v2183
        %v2312 = vunpack.c.l.b16 %v2184
        %v2313 = vunpack.c.l.b16 %v2185
        %v2314 = vunpack.c.l.b16 %v2186
        %v2315 = vunpack.c.l.b16 %v2187
        %v2316 = vunpack.c.l.b16 %v2188
        %v2317 = vunpack.c.l.b16 %v2189
        %v2318 = vunpack.c.l.b16 %v2190
        %v2319 = vunpack.c.l.b16 %v2191
        %v2320 = vunpack.c.l.b16 %v2192
        %v2321 = vunpack.c.l.b16 %v2193
        %v2322 = vunpack.c.l.b16 %v2194
        %v2323 = vunpack.c.l.b16 %v2195
        %v2324 = vunpack.c.l.b16 %v2196
        %v2325 = vunpack.c.l.b16 %v2197
        %v2326 = vpack.c.b16 %v2263, %v2262
        %v2327 = vpack.c.b16 %v2265, %v2264
        %v2328 = vpack.c.b16 %v2267, %v2266
        %v2329 = vpack.c.b16 %v2269, %v2268
        %v2330 = vpack.c.b16 %v2271, %v2270
        %v2331 = vpack.c.b16 %v2273, %v2272
        %v2332 = vpack.c.b16 %v2275, %v2274
        %v2333 = vpack.c.b16 %v2277, %v2276
        %v2334 = vpack.c.b16 %v2279, %v2278
        %v2335 = vpack.c.b16 %v2281, %v2280
        %v2336 = vpack.c.b16 %v2283, %v2282
        %v2337 = vpack.c.b16 %v2285, %v2284
        %v2338 = vpack.c.b16 %v2287, %v2286
        %v2339 = vpack.c.b16 %v2289, %v2288
        %v2340 = vpack.c.b16 %v2291, %v2290
        %v2341 = vpack.c.b16 %v2293, %v2292
        %v2342 = vpack.c.b16 %v2295, %v2294
        %v2343 = vpack.c.b16 %v2297, %v2296
        %v2344 = vpack.c.b16 %v2299, %v2298
        %v2345 = vpack.c.b16 %v2301, %v2300
        %v2346 = vpack.c.b16 %v2303, %v2302
        %v2347 = vpack.c.b16 %v2305, %v2304
        %v2348 = vpack.c.b16 %v2307, %v2306
        %v2349 = vpack.c.b16 %v2309, %v2308
        %v2350 = vpack.c.b16 %v2311, %v2310
        %v2351 = vpack.c.b16 %v2313, %v2312
        %v2352 = vpack.c.b16 %v2315, %v2314
        %v2353 = vpack.c.b16 %v2317, %v2316
        %v2354 = vpack.c.b16 %v2319, %v2318
        %v2355 = vpack.c.b16 %v2321, %v2320
        %v2356 = vpack.c.b16 %v2323, %v2322
        %v2357 = vpack.c.b16 %v2325, %v2324
        %2390 = vmatprep.subr.bf16.mxu0 0
        %2391 = vmatpush1.bf16.msra.mxu0 %v2326
        %2392 = vmatprep.subr.bf16.mxu0 0
        %2393 = vmatpush1.bf16.msra.mxu0 %v2327
        %2394 = vmatprep.subr.bf16.mxu0 0
        %2395 = vmatpush1.bf16.msra.mxu0 %v2328
        %2396 = vmatprep.subr.bf16.mxu0 0
        %2397 = vmatpush1.bf16.msra.mxu0 %v2329
        %2398 = vmatprep.subr.bf16.mxu0 0
        %2399 = vmatpush1.bf16.msra.mxu0 %v2330
        %2400 = vmatprep.subr.bf16.mxu0 0
        %2401 = vmatpush1.bf16.msra.mxu0 %v2331
        %2402 = vmatprep.subr.bf16.mxu0 0
        %2403 = vmatpush1.bf16.msra.mxu0 %v2332
        %2404 = vmatprep.subr.bf16.mxu0 0
        %2405 = vmatpush1.bf16.msra.mxu0 %v2333
        %2406 = vmatprep.subr.bf16.mxu0 0
        %2407 = vmatpush1.bf16.msra.mxu0 %v2334
        %2408 = vmatprep.subr.bf16.mxu0 0
        %2409 = vmatpush1.bf16.msra.mxu0 %v2335
        %2410 = vmatprep.subr.bf16.mxu0 0
        %2411 = vmatpush1.bf16.msra.mxu0 %v2336
        %2412 = vmatprep.subr.bf16.mxu0 0
        %2413 = vmatpush1.bf16.msra.mxu0 %v2337
        %2414 = vmatprep.subr.bf16.mxu0 0
        %2415 = vmatpush1.bf16.msra.mxu0 %v2338
        %2416 = vmatprep.subr.bf16.mxu0 0
        %2417 = vmatpush1.bf16.msra.mxu0 %v2339
        %2418 = vmatprep.subr.bf16.mxu0 0
        %2419 = vmatpush1.bf16.msra.mxu0 %v2340
        %2420 = vmatprep.subr.bf16.mxu0 0
        %2421 = vmatpush1.bf16.msra.mxu0 %v2341
        %2422 = vmatprep.mubr.bf16.mxu0 %v2131
        %2423 = vmatmul.mubr.bf16.gmra.mrb[0].mxu0 %v2130
        %v2424 = vpop.f32.mrb[0].mxu0
        %v2425 = vadd.f32 0.0, %v2424
        %v2426 = vpop.f32.mrb[0].mxu0
        %v2427 = vpop.f32.mrb[0].mxu0
        %v2428 = vadd.f32 0.0, %v2427
        %v2429 = vpop.f32.mrb[0].mxu0
        %2430 = vdwg.mxu0
        %2431 = vmatprep.subr.bf16.mxu0 0
        %2432 = vmatpush1.bf16.msra.mxu0 %v2342
        %2433 = vmatprep.subr.bf16.mxu0 0
        %2434 = vmatpush1.bf16.msra.mxu0 %v2343
        %2435 = vmatprep.subr.bf16.mxu0 0
        %2436 = vmatpush1.bf16.msra.mxu0 %v2344
        %2437 = vmatprep.subr.bf16.mxu0 0
        %2438 = vmatpush1.bf16.msra.mxu0 %v2345
        %2439 = vmatprep.subr.bf16.mxu0 0
        %2440 = vmatpush1.bf16.msra.mxu0 %v2346
        %2441 = vmatprep.subr.bf16.mxu0 0
        %2442 = vmatpush1.bf16.msra.mxu0 %v2347
        %2443 = vmatprep.subr.bf16.mxu0 0
        %2444 = vmatpush1.bf16.msra.mxu0 %v2348
        %2445 = vmatprep.subr.bf16.mxu0 0
        %2446 = vmatpush1.bf16.msra.mxu0 %v2349
        %2447 = vmatprep.subr.bf16.mxu0 0
        %2448 = vmatpush1.bf16.msra.mxu0 %v2350
        %2449 = vmatprep.subr.bf16.mxu0 0
        %2450 = vmatpush1.bf16.msra.mxu0 %v2351
        %2451 = vmatprep.subr.bf16.mxu0 0
        %2452 = vmatpush1.bf16.msra.mxu0 %v2352
        %2453 = vmatprep.subr.bf16.mxu0 0
        %2454 = vmatpush1.bf16.msra.mxu0 %v2353
        %2455 = vmatprep.subr.bf16.mxu0 0
        %2456 = vmatpush1.bf16.msra.mxu0 %v2354
        %2457 = vmatprep.subr.bf16.mxu0 0
        %2458 = vmatpush1.bf16.msra.mxu0 %v2355
        %2459 = vmatprep.subr.bf16.mxu0 0
        %2460 = vmatpush1.bf16.msra.mxu0 %v2356
        %2461 = vmatprep.subr.bf16.mxu0 0
        %2462 = vmatpush1.bf16.msra.mxu0 %v2357
        %2463 = vmatprep.mubr.bf16.mxu0 %v2133
        %2464 = vmatmul.mubr.bf16.gmra.mrb[0].mxu0 %v2132
        %v2465 = vpop.f32.mrb[0].mxu0
        %v2466 = vadd.f32 %v2425, %v2465
        %v2467 = vpop.f32.mrb[0].mxu0
        %v2468 = vpop.f32.mrb[0].mxu0
        %v2469 = vadd.f32 %v2428, %v2468
        %v2470 = vpop.f32.mrb[0].mxu0
        %2471 = vdwg.mxu0
        %v2472 = vadd.f32 %v1484, %v2466
        %v2473 = vadd.f32 %v1485, %v2469
        %2474 = vst [vmem:[#allocation2] sm:$0xff] %v2472
        %2475 = vst [vmem:[#allocation2 + $0x8] sm:$0xff] %v2473
        %p2476 = scmp.eq.s32.totalorder %s26, 1
        // Predicated region
        $region101: #{tpu_custom_call.1} parent=63 // pred_check
          %p2477 = pneg %p2476
        $region102: #{tpu_custom_call.1} parent=63 // pred_check_branch
          %2479 = sbr.rel (%p2477) target = $region104
        $region103: #{tpu_custom_call.1} parent=63 // pred_region
          %v2480 = vmul.f32 %v2472, %v2472
          %v2481 = vmul.f32 %v2473, %v2473
          %2482 = vadd.xlane.f32.xlu0 %v2480
          %v2483 = vpop.xlane.xlu0 %2482
          %2484 = vadd.xlane.f32.xlu0 %v2481
          %v2485 = vpop.xlane.xlu0 %2484
          %v2486 = vmul.f32 %v2483, %v605
          %v2487 = vmul.f32 %v2485, %v605
          %v2488 = vadd.f32 %v2486, 1e-05
          %v2489 = vadd.f32 %v2487, 1e-05
          %v2490 = vrsqrt.pop %v2488
          %v2491 = vrsqrt.pop %v2489
          %v2492 = vmul.f32 %v2472, %v2490
          %v2493 = vmul.f32 %v2473, %v2491
          %v2494 = vld [vmem:[%s4] sm:$0x1]
          %v2496 = vlaneseq
          %v2497 = vshrl.u32 %v2496, 7
          %v2498 = vsub.s32 0, %v2497
          %v2499 = vrot.slane %v2494, %v2498
          %v2501 = vmul.f32 %v2492, %v2499
          %v2502 = vmul.f32 %v2493, %v2499
          %2503 = vst [vmem:[#allocation15] sm:$0xff] %v2501
          %2504 = vst [vmem:[#allocation15 + $0x8] sm:$0xff] %v2502
        $region104: #{tpu_custom_call.1} parent=63 // pred_fallthru
          _
        // Predicated region
        $region105: #{tpu_custom_call.1} parent=63 // pred_check
          %p2505 = pneg %p300
        $region106: #{tpu_custom_call.1} parent=63 // pred_check_branch
          %2507 = sbr.rel (%p2505) target = $region108
        $region107: #{tpu_custom_call.1} parent=63 // pred_region
          %s2509 = ssub.s32 256, 256
          %2510 = vsyncadd [#allocation5], %s2509
          %s2511 = sshll.u32 [#allocation15], 4
          %s2512 = int_to_ptr.vmem [resolvable:$true] %s2511
          %2517 = dma.vmem_to_hbm [thread:$0]  %s2512, 256, %s11, [#allocation5], 128, 128, 8
        $region108: #{tpu_custom_call.1} parent=63 // pred_fallthru
          _
        // Predicated region
        $region109: #{tpu_custom_call.1} parent=63 // pred_check
          %p2518 = pneg %p300
        $region110: #{tpu_custom_call.1} parent=63 // pred_check_branch
          %2520 = sbr.rel (%p2518) target = $region112
        $region111: #{tpu_custom_call.1} parent=63 // pred_region
          %2521 = dma.done [#allocation5], 256
        $region112: #{tpu_custom_call.1} parent=63 // pred_fallthru
          _
      $region64: #{tpu_custom_call.1} parent=5 // pred_fallthru
        _
      %p2522 = scmp.le.s32.totalorder 2, %s21
      // Predicated region
      $region113: #{tpu_custom_call.1} parent=5 // pred_check
        %p2523 = pneg %p2522
      $region114: #{tpu_custom_call.1} parent=5 // pred_check_branch
        %2525 = sbr.rel (%p2523) target = $region116
      $region115: #{tpu_custom_call.1} parent=5 // pred_region
        %s2526 = ssub.s32 %s21, 2
      $region116: #{tpu_custom_call.1} parent=5 // pred_fallthru
        _
    $region6: #{tpu_custom_call.1} parent=1 // loop_footer
      %s25 = sadd.s32 1, %s21
    $region7: #{tpu_custom_call.1} parent=1 // loop_footer_branch
      %20 = sbr.rel target = $region3
    $region8: #{tpu_custom_call.1} parent=1 // loop_exit
      _
    %2527 = vsyncpa [#allocation4], 1
    %s2528 = scalar_lea.sflag [#allocation4], 1
    %2529 = vsyncpa %s2528, 1
    %2530 = vsyncpa [#allocation7], 1
    %2531 = vsyncpa [#allocation10], 1
    %2532 = vsyncpa [#allocation5], 1
    %s2533 = scalar_lea.sflag [#allocation5], 1
    %2534 = vsyncpa %s2533, 1

</llo_original>
